<compile_context>
chip_gen: v7x
topology: tpu7x:2x2x1
jax: 0.10.0
libtpu: 0.0.40
codegen_flags: <defaults>
</compile_context>

<pallas_src>
import math
from functools import partial

import jax
import jax.numpy as jnp
from jax.experimental import pallas as pl
from jax.experimental.pallas import tpu as pltpu


# ----------------------------- tile helpers -----------------------------

def _round_up(x, m):
    return ((x + m - 1) // m) * m


def _row_tile(m, pref=256):
    """Sublane-axis tile: prefer `pref`, else a divisor that is a multiple of 8, else full."""
    if m <= pref:
        return m
    for t in (pref, 128, 64, 32, 16, 8):
        if m % t == 0:
            return t
    return m


def _lane_tile(n, pref=512):
    """Lane-axis tile: prefer `pref`, else a 128-multiple divisor, else full."""
    if n <= pref:
        return n
    for t in (pref, 256, 128):
        if n % t == 0:
            return t
    return n


# ----------------------------- tiled linear (+bias, optional ReLU) -----------------------------

def _linear_kernel(x_ref, w_ref, b_ref, o_ref, acc_ref, *, relu):
    @pl.when(pl.program_id(2) == 0)
    def _init():
        acc_ref[...] = jnp.zeros_like(acc_ref)

    acc_ref[...] += jnp.dot(x_ref[...], w_ref[...],
                            preferred_element_type=jnp.float32)

    @pl.when(pl.program_id(2) == pl.num_programs(2) - 1)
    def _fin():
        y = acc_ref[...] + b_ref[...]
        if relu:
            y = jnp.maximum(y, 0.0)
        o_ref[...] = y.astype(o_ref.dtype)


def linear(x, w, b, *, relu=False):
    """y = x @ w + b (optional fused ReLU). bf16 in / bf16 out, f32 accumulation."""
    M, K = x.shape
    N = w.shape[1]
    tm, tn, tk = _row_tile(M), _lane_tile(N), _lane_tile(K)
    return pl.pallas_call(
        partial(_linear_kernel, relu=relu),
        out_shape=jax.ShapeDtypeStruct((M, N), jnp.bfloat16),
        grid=(M // tm, N // tn, K // tk),
        in_specs=[pl.BlockSpec((tm, tk), lambda i, j, k: (i, k)),
                  pl.BlockSpec((tk, tn), lambda i, j, k: (k, j)),
                  pl.BlockSpec((1, tn), lambda i, j, k: (0, j))],
        out_specs=pl.BlockSpec((tm, tn), lambda i, j, k: (i, j)),
        scratch_shapes=[pltpu.VMEM((tm, tn), jnp.float32)],
        compiler_params=pltpu.CompilerParams(
            dimension_semantics=("parallel", "parallel", "arbitrary")),
    )(x, w, b)


# --------------------- matmul with fused bias + residual-add + LayerNorm epilogue ---------------------

def _linear_add_ln_kernel(x_ref, w_ref, b_ref, r_ref, g_ref, bb_ref, o_ref, acc_ref, *, eps):
    @pl.when(pl.program_id(1) == 0)
    def _init():
        acc_ref[...] = jnp.zeros_like(acc_ref)

    acc_ref[...] += jnp.dot(x_ref[...], w_ref[...],
                            preferred_element_type=jnp.float32)

    @pl.when(pl.program_id(1) == pl.num_programs(1) - 1)
    def _fin():
        z = acc_ref[...] + b_ref[...] + r_ref[...].astype(jnp.float32)
        mu = jnp.mean(z, axis=-1, keepdims=True)
        diff = z - mu
        var = jnp.mean(diff * diff, axis=-1, keepdims=True)
        o_ref[...] = (diff * jax.lax.rsqrt(var + eps) * g_ref[...] + bb_ref[...]
                      ).astype(o_ref.dtype)


def linear_add_ln(x, w, b, residual, gamma, beta, *, eps=1e-5):
    """LayerNorm(residual + x @ w + b); residual-add + LN fused into the matmul epilogue."""
    M, K = x.shape
    N = w.shape[1]                      # LN needs the full feature row in one tile
    tm, tk = _row_tile(M), _lane_tile(K)
    return pl.pallas_call(
        partial(_linear_add_ln_kernel, eps=eps),
        out_shape=jax.ShapeDtypeStruct((M, N), jnp.bfloat16),
        grid=(M // tm, K // tk),
        in_specs=[pl.BlockSpec((tm, tk), lambda i, k: (i, k)),
                  pl.BlockSpec((tk, N), lambda i, k: (k, 0)),
                  pl.BlockSpec((1, N), lambda i, k: (0, 0)),
                  pl.BlockSpec((tm, N), lambda i, k: (i, 0)),     # residual (bf16)
                  pl.BlockSpec((1, N), lambda i, k: (0, 0)),
                  pl.BlockSpec((1, N), lambda i, k: (0, 0))],
        out_specs=pl.BlockSpec((tm, N), lambda i, k: (i, 0)),
        scratch_shapes=[pltpu.VMEM((tm, N), jnp.float32)],
        compiler_params=pltpu.CompilerParams(
            dimension_semantics=("parallel", "arbitrary")),
    )(x, w, b, residual, gamma, beta)


# ----------------------------- fused FFN: W1 + ReLU + W2 + residual + LayerNorm -----------------------------

def _ffn_kernel(x_ref, w1_ref, b1_ref, w2_ref, b2_ref, r_ref, g_ref, bb_ref, o_ref, *, eps):
    h = jnp.dot(x_ref[...], w1_ref[...], preferred_element_type=jnp.float32) + b1_ref[...]
    h = jnp.maximum(h, 0.0).astype(jnp.bfloat16)
    z = jnp.dot(h, w2_ref[...], preferred_element_type=jnp.float32) + b2_ref[...]
    z = z + r_ref[...].astype(jnp.float32)
    mu = jnp.mean(z, axis=-1, keepdims=True)
    diff = z - mu
    var = jnp.mean(diff * diff, axis=-1, keepdims=True)
    o_ref[...] = (diff * jax.lax.rsqrt(var + eps) * g_ref[...] + bb_ref[...]).astype(o_ref.dtype)


def ffn_add_ln(x, w1, b1, w2, b2, residual, gamma, beta, *, eps=1e-5):
    """LayerNorm(residual + W2(relu(W1 x))) in ONE pallas_call; the dff hidden never hits HBM."""
    # TODO(synk): at production D/dff the W1/W2 panels need K/N tiling; they fit VMEM here.
    M, D = x.shape
    dff = w1.shape[1]
    tm = _row_tile(M)
    return pl.pallas_call(
        partial(_ffn_kernel, eps=eps),
        out_shape=jax.ShapeDtypeStruct((M, D), jnp.bfloat16),
        grid=(M // tm,),
        in_specs=[pl.BlockSpec((tm, D), lambda i: (i, 0)),
                  pl.BlockSpec((D, dff), lambda i: (0, 0)),
                  pl.BlockSpec((1, dff), lambda i: (0, 0)),
                  pl.BlockSpec((dff, D), lambda i: (0, 0)),
                  pl.BlockSpec((1, D), lambda i: (0, 0)),
                  pl.BlockSpec((tm, D), lambda i: (i, 0)),
                  pl.BlockSpec((1, D), lambda i: (0, 0)),
                  pl.BlockSpec((1, D), lambda i: (0, 0))],
        out_specs=pl.BlockSpec((tm, D), lambda i: (i, 0)),
        compiler_params=pltpu.CompilerParams(dimension_semantics=("parallel",)),
    )(x, w1, b1, w2, b2, residual, gamma, beta)


# ----------------------------- fused final projection + softmax (exact divide) -----------------------------

def _linear_softmax_kernel(x_ref, w_ref, b_ref, o_ref, acc_ref, *, v_true):
    @pl.when(pl.program_id(1) == 0)
    def _init():
        acc_ref[...] = jnp.zeros_like(acc_ref)

    acc_ref[...] += jnp.dot(x_ref[...], w_ref[...],
                            preferred_element_type=jnp.float32)

    @pl.when(pl.program_id(1) == pl.num_programs(1) - 1)
    def _fin():
        logits = acc_ref[...] + b_ref[...]
        col = jax.lax.broadcasted_iota(jnp.int32, logits.shape, 1)
        logits = jnp.where(col < v_true, logits, -1.0e30)     # mask vocab lane padding
        m = jnp.max(logits, axis=-1, keepdims=True)
        e = jnp.exp(logits - m)
        # Exact divide for the model output (approx reciprocal is only used internally).
        o_ref[...] = (e / jnp.sum(e, axis=-1, keepdims=True)).astype(o_ref.dtype)


def linear_softmax(x, w, b, v_true):
    """softmax(x @ w + b) over the vocab axis; w/b already padded to 128-lane multiple."""
    # TODO(synk): for 32k+ vocab the vocab axis should be tiled with a two-pass/online softmax.
    M, K = x.shape
    Np = w.shape[1]
    tm, tk = _row_tile(M), _lane_tile(K)
    return pl.pallas_call(
        partial(_linear_softmax_kernel, v_true=v_true),
        out_shape=jax.ShapeDtypeStruct((M, Np), jnp.float32),
        grid=(M // tm, K // tk),
        in_specs=[pl.BlockSpec((tm, tk), lambda i, k: (i, k)),
                  pl.BlockSpec((tk, Np), lambda i, k: (k, 0)),
                  pl.BlockSpec((1, Np), lambda i, k: (0, 0))],
        out_specs=pl.BlockSpec((tm, Np), lambda i, k: (i, 0)),
        scratch_shapes=[pltpu.VMEM((tm, Np), jnp.float32)],
        compiler_params=pltpu.CompilerParams(
            dimension_semantics=("parallel", "arbitrary")),
    )(x, w, b)


# ----------------------------- attention (heads batched per grid step) -----------------------------

def _attn_kernel(q_ref, k_ref, v_ref, mask_ref, o_ref, *, scale):
    q = q_ref[...]                                    # (hc, S, dk) bf16
    k = k_ref[...]
    v = v_ref[...]
    s = jnp.einsum("hqd,hkd->hqk", q, k,
                   preferred_element_type=jnp.float32) * scale
    s = jnp.where(mask_ref[...] == 0.0, -1.0e9, s)    # mask (1,S,S) broadcasts over heads
    m = jnp.max(s, axis=-1, keepdims=True)
    e = jnp.exp(s - m)
    p = e * pl.reciprocal(jnp.sum(e, axis=-1, keepdims=True), approx=True)
    o_ref[...] = jnp.einsum("hqk,hkd->hqd", p.astype(v.dtype), v,
                            preferred_element_type=jnp.float32).astype(o_ref.dtype)


def _heads_per_step(bh):
    # Batch several (tiny) heads per grid step while keeping >= 2 parallel grid steps when
    # possible so both v7x TensorCores get work (neutral on single-TC v5e/v6e).
    for c in (8, 4, 2):
        if bh % c == 0 and bh // c >= 2:
            return c
    return bh


def attention(qh, kh, vh, mask, scale):
    """qh/kh/vh: (B*H, S, dk) bf16; mask: (1, S, S) f32, broadcast via index_map (never
    materialized at (B*H, S, S) in HBM)."""
    # TODO(synk): for long S this should become a flash-style KV-tiled online-softmax kernel,
    # and at production dk the output should be written in a lane-dense merged (S, hc*dk) layout.
    BH, S, dk = qh.shape
    hc = _heads_per_step(BH)
    qkv_spec = pl.BlockSpec((hc, S, dk), lambda i: (i, 0, 0))
    mask_spec = pl.BlockSpec((1, S, S), lambda i: (0, 0, 0))
    return pl.pallas_call(
        partial(_attn_kernel, scale=scale),
        out_shape=jax.ShapeDtypeStruct((BH, S, dk), jnp.bfloat16),
        grid=(BH // hc,),
        in_specs=[qkv_spec, qkv_spec, qkv_spec, mask_spec],
        out_specs=qkv_spec,
        compiler_params=pltpu.CompilerParams(dimension_semantics=("parallel",)),
    )(qh, kh, vh, mask)


# ----------------------------- model glue (plain JAX between kernels) -----------------------------

def mha_sublayer(x2, B, S, D, p, mask3, num_heads):
    """Fused-QKV projection + (quirky-split) attention. Returns pre-o_proj context (B*S, D) bf16."""
    dk = D // num_heads
    qkv = linear(x2, p["wqkv"], p["bqkv"])                    # one fused (D, 3D) projection
    Q, K, V = qkv[:, :D], qkv[:, D:2 * D], qkv[:, 2 * D:]
    # Reproduce torch's Q.reshape(B, H, S, d_k) with NO transpose: pure row-major reinterpret
    # (free XLA reshape; TODO(synk): fold into the attention kernel once in-kernel reshapes of
    # this quirky split lower reliably, to collapse the whole MHA sublayer into one call).
    Qh = Q.reshape(B * num_heads, S, dk)
    Kh = K.reshape(B * num_heads, S, dk)
    Vh = V.reshape(B * num_heads, S, dk)
    ctx = attention(Qh, Kh, Vh, mask3, 1.0 / math.sqrt(dk))
    return ctx.reshape(B * S, D)                              # == .contiguous().view(B, S, D)


def decoder_block(x2, B, S, D, p, mask3, num_heads):
    c1 = mha_sublayer(x2, B, S, D, p["mha1"], mask3, num_heads)
    n1 = linear_add_ln(c1, p["mha1"]["wo"], p["mha1"]["bo"], x2, p["ln1_g"], p["ln1_b"])
    c2 = mha_sublayer(n1, B, S, D, p["mha2"], mask3, num_heads)
    n2 = linear_add_ln(c2, p["mha2"]["wo"], p["mha2"]["bo"], n1, p["ln2_g"], p["ln2_b"])
    n3 = ffn_add_ln(n2, p["ffn"]["w1"], p["ffn"]["b1"], p["ffn"]["w2"], p["ffn"]["b2"],
                    n2, p["ln3_g"], p["ln3_b"])
    return n3


def gpt_forward(kparams, token_ids, pos_ids, atten_mask, num_heads, vocab_size):
    # Embedding gathers kept as JAX glue (data-dependent gather).
    tok_emb = jnp.take(kparams["token_emb"], token_ids, axis=0)   # (B, S, D) f32
    pos_emb = jnp.take(kparams["pos_emb"], pos_ids, axis=0)       # (B, S, D) f32
    x = (tok_emb + pos_emb).astype(jnp.bfloat16)                  # bf16 activations from here on
    B, S, D = x.shape
    mask3 = atten_mask.astype(jnp.float32)[None, :, :]            # (1, S, S), broadcast in-kernel
    x2 = x.reshape(B * S, D)
    for blk in kparams["blocks"]:
        x2 = decoder_block(x2, B, S, D, blk, mask3, num_heads)
    probs = linear_softmax(x2, kparams["w_out"], kparams["b_out"], vocab_size)
    return probs[:, :vocab_size].reshape(B, S, vocab_size)


# ----------------------------- params: init (f32) + one-time kernel prep -----------------------------

def init_params(key, vocab_size, d_model, num_layers, max_len):
    dff = d_model * 4
    keys = iter(jax.random.split(key, 256))

    def lin(k_in, k_out):
        return (jax.random.normal(next(keys), (k_in, k_out), jnp.float32) * 0.02,
                jnp.zeros((k_out,), jnp.float32))

    def mha_params():
        # Fused QKV weight: three (d_model, d_model) Linears concatenated on the output axis.
        wqkv, bqkv = lin(d_model, 3 * d_model)
        wo, bo = lin(d_model, d_model)
        return dict(wqkv=wqkv, bqkv=bqkv, wo=wo, bo=bo)

    blocks = []
    for _ in range(num_layers):
        w1, b1 = lin(d_model, dff)
        w2, b2 = lin(dff, d_model)
        blocks.append(dict(
            mha1=mha_params(), mha2=mha_params(),
            ln1_g=jnp.ones((d_model,), jnp.float32), ln1_b=jnp.zeros((d_model,), jnp.float32),
            ln2_g=jnp.ones((d_model,), jnp.float32), ln2_b=jnp.zeros((d_model,), jnp.float32),
            ln3_g=jnp.ones((d_model,), jnp.float32), ln3_b=jnp.zeros((d_model,), jnp.float32),
            ffn=dict(w1=w1, b1=b1, w2=w2, b2=b2),
        ))

    w_out, b_out = lin(d_model, vocab_size)
    return dict(
        token_emb=jax.random.normal(next(keys), (vocab_size, d_model), jnp.float32) * 0.02,
        pos_emb=jax.random.normal(next(keys), (max_len, d_model), jnp.float32) * 0.02,
        blocks=blocks, w_out=w_out, b_out=b_out,
    )


def prepare_params(params):
    """One-time conversion to kernel layout: bf16 MXU weights, (1, N) f32 biases / LN params,
    vocab axis padded once to a 128-lane multiple. No per-layer pad/cast glue at runtime."""
    def row(v): return v.reshape(1, -1).astype(jnp.float32)
    def bf(w): return w.astype(jnp.bfloat16)

    def mha(p): return dict(wqkv=bf(p["wqkv"]), bqkv=row(p["bqkv"]),
                            wo=bf(p["wo"]), bo=row(p["bo"]))

    blocks = []
    for b in params["blocks"]:
        blocks.append(dict(
            mha1=mha(b["mha1"]), mha2=mha(b["mha2"]),
            ffn=dict(w1=bf(b["ffn"]["w1"]), b1=row(b["ffn"]["b1"]),
                     w2=bf(b["ffn"]["w2"]), b2=row(b["ffn"]["b2"])),
            ln1_g=row(b["ln1_g"]), ln1_b=row(b["ln1_b"]),
            ln2_g=row(b["ln2_g"]), ln2_b=row(b["ln2_b"]),
            ln3_g=row(b["ln3_g"]), ln3_b=row(b["ln3_b"]),
        ))

    D, V = params["w_out"].shape
    Vp = _round_up(V, 128)
    w_out = bf(jnp.pad(params["w_out"], ((0, 0), (0, Vp - V))))
    b_out = jnp.pad(params["b_out"], (0, Vp - V)).reshape(1, Vp).astype(jnp.float32)
    return dict(token_emb=params["token_emb"], pos_emb=params["pos_emb"],
                blocks=blocks, w_out=w_out, b_out=b_out)


# ----------------------------- main -----------------------------

if __name__ == "__main__":
    vocab_size, d_model, num_heads, n_layers, max_len = 50, 32, 4, 2, 25
    batch, seq = 2, 8

    key = jax.random.PRNGKey(0)
    k_param, k_tok = jax.random.split(key)
    params = init_params(k_param, vocab_size, d_model, n_layers, max_len)
    kparams = prepare_params(params)          # one-time bf16/padding conversion

    token_ids = jax.random.randint(k_tok, (batch, seq), 0, vocab_size, dtype=jnp.int32)
    pos_ids = jnp.tile(jnp.arange(seq, dtype=jnp.int32)[None, :], (batch, 1))
    # causal attention mask (S, S): 1 = keep, 0 = masked (-1e9)
    atten_mask = jnp.tril(jnp.ones((seq, seq), jnp.float32))

    fwd = jax.jit(gpt_forward, static_argnames=("num_heads", "vocab_size"))
    out = fwd(kparams, token_ids, pos_ids, atten_mask,
              num_heads=num_heads, vocab_size=vocab_size)
    out = jax.block_until_ready(out)

    assert out.shape == (batch, seq, vocab_size)
    assert bool(jnp.all(jnp.isfinite(out)))
    # final softmax uses an exact divide -> rows sum to 1 up to f32 rounding
    assert bool(jnp.allclose(jnp.sum(out, axis=-1), 1.0, atol=1e-3))
    # NOTE: activations/weights are bf16 on the MXU (f32 accumulation), so values match an
    # f32 PyTorch reference only to ~1e-2 relative.
    print("KERNEL_OK")
</pallas_src>

<mosaic_0001>
module attributes {stable_mosaic.version = 11 : i64} {
  func.func @_linear_kernel(%arg0: i32, %arg1: i32, %arg2: i32, %arg3: memref<16x32xbf16, #tpu.memory_space<vmem>>, %arg4: memref<32x96xbf16, #tpu.memory_space<vmem>>, %arg5: memref<1x96xf32, #tpu.memory_space<vmem>>, %arg6: memref<16x96xbf16, #tpu.memory_space<vmem>>, %arg7: memref<16x96xf32, #tpu.memory_space<vmem>>) attributes {dimension_semantics = [#tpu.dimension_semantics<parallel>, #tpu.dimension_semantics<parallel>, #tpu.dimension_semantics<arbitrary>], iteration_bounds = array<i64: 1, 1, 1>, scalar_prefetch = 0 : i64, scratch_operands = 1 : i64, tpu.core_type = #tpu.core_type<tc>, window_params = [{transform_indices = @transform_0, window_bounds = array<i64: 16, 32>}, {transform_indices = @transform_1, window_bounds = array<i64: 32, 96>}, {transform_indices = @transform_2, window_bounds = array<i64: 1, 96>}, {transform_indices = @transform_3, window_bounds = array<i64: 16, 96>}]} {
    %c0_i32 = arith.constant 0 : i32
    %0 = arith.cmpi eq, %arg2, %c0_i32 : i32
    %1 = arith.extui %0 : i1 to i32
    %c0_i32_0 = arith.constant 0 : i32
    %2 = arith.cmpi ne, %1, %c0_i32_0 : i32
    scf.if %2 {
      %cst_10 = arith.constant 0.000000e+00 : f32
      %12 = vector.broadcast %cst_10 : f32 to vector<16x96xf32>
      %c0_11 = arith.constant 0 : index
      %c0_12 = arith.constant 0 : index
      %13 = vector.load %arg7[%c0_11, %c0_12] : memref<16x96xf32, #tpu.memory_space<vmem>>, vector<16x96xf32>
      tpu.vector_store %arg7[%c0_11, %c0_12], %12 {strides = array<i32>} : memref<16x96xf32, #tpu.memory_space<vmem>>, vector<16x96xf32>,
    } else {
    }
    %c0 = arith.constant 0 : index
    %c0_1 = arith.constant 0 : index
    %3 = vector.load %arg7[%c0, %c0_1] : memref<16x96xf32, #tpu.memory_space<vmem>>, vector<16x96xf32>
    %c0_2 = arith.constant 0 : index
    %c0_3 = arith.constant 0 : index
    %4 = vector.load %arg3[%c0_2, %c0_3] : memref<16x32xbf16, #tpu.memory_space<vmem>>, vector<16x32xbf16>
    %c0_4 = arith.constant 0 : index
    %c0_5 = arith.constant 0 : index
    %5 = vector.load %arg4[%c0_4, %c0_5] : memref<32x96xbf16, #tpu.memory_space<vmem>>, vector<32x96xbf16>
    %cst = arith.constant dense<0.000000e+00> : vector<16x96xf32>
    %6 = tpu.matmul %4, %5, %cst {dimension_numbers = #tpu.dot_dimension_numbers<[1], [0], [0], [1], [0, 0, 1, 1], [], []>} : vector<16x32xbf16>, vector<32x96xbf16>, vector<16x96xf32> -> vector<16x96xf32>
    %7 = arith.addf %3, %6 : vector<16x96xf32>
    %c0_6 = arith.constant 0 : index
    %c0_7 = arith.constant 0 : index
    %8 = vector.load %arg7[%c0_6, %c0_7] : memref<16x96xf32, #tpu.memory_space<vmem>>, vector<16x96xf32>
    tpu.vector_store %arg7[%c0_6, %c0_7], %7 {strides = array<i32>} : memref<16x96xf32, #tpu.memory_space<vmem>>, vector<16x96xf32>,
    %c0_i32_8 = arith.constant 0 : i32
    %9 = arith.cmpi eq, %arg2, %c0_i32_8 : i32
    %10 = arith.extui %9 : i1 to i32
    %c0_i32_9 = arith.constant 0 : i32
    %11 = arith.cmpi ne, %10, %c0_i32_9 : i32
    scf.if %11 {
      %c0_10 = arith.constant 0 : index
      %c0_11 = arith.constant 0 : index
      %12 = vector.load %arg7[%c0_10, %c0_11] : memref<16x96xf32, #tpu.memory_space<vmem>>, vector<16x96xf32>
      %c0_12 = arith.constant 0 : index
      %c0_13 = arith.constant 0 : index
      %13 = vector.load %arg5[%c0_12, %c0_13] : memref<1x96xf32, #tpu.memory_space<vmem>>, vector<1x96xf32>
      %14 = vector.broadcast %13 : vector<1x96xf32> to vector<16x96xf32>
      %15 = arith.addf %12, %14 : vector<16x96xf32>
      %16 = arith.truncf %15 : vector<16x96xf32> to vector<16x96xbf16>
      %c0_14 = arith.constant 0 : index
      %c0_15 = arith.constant 0 : index
      %17 = vector.load %arg6[%c0_14, %c0_15] : memref<16x96xbf16, #tpu.memory_space<vmem>>, vector<16x96xbf16>
      tpu.vector_store %arg6[%c0_14, %c0_15], %16 {strides = array<i32>} : memref<16x96xbf16, #tpu.memory_space<vmem>>, vector<16x96xbf16>,
    } else {
    }
    return
  }
  func.func @transform_0(%arg0: i32, %arg1: i32, %arg2: i32) -> (i32, i32) {
    %c0_i32 = arith.constant 0 : i32
    return %arg0, %arg2 : i32, i32
  }
  func.func @transform_1(%arg0: i32, %arg1: i32, %arg2: i32) -> (i32, i32) {
    %c0_i32 = arith.constant 0 : i32
    return %arg2, %arg1 : i32, i32
  }
  func.func @transform_2(%arg0: i32, %arg1: i32, %arg2: i32) -> (i32, i32) {
    %c0_i32 = arith.constant 0 : i32
    %c0_i32_0 = arith.constant 0 : i32
    return %c0_i32, %arg1 : i32, i32
  }
  func.func @transform_3(%arg0: i32, %arg1: i32, %arg2: i32) -> (i32, i32) {
    %c0_i32 = arith.constant 0 : i32
    return %arg0, %arg1 : i32, i32
  }
}

module attributes {stable_mosaic.version = 11 : i64} {
  func.func @_attn_kernel(%arg0: i32, %arg1: memref<4x8x8xbf16, #tpu.memory_space<vmem>>, %arg2: memref<4x8x8xbf16, #tpu.memory_space<vmem>>, %arg3: memref<4x8x8xbf16, #tpu.memory_space<vmem>>, %arg4: memref<1x8x8xf32, #tpu.memory_space<vmem>>, %arg5: memref<4x8x8xbf16, #tpu.memory_space<vmem>>) attributes {dimension_semantics = [#tpu.dimension_semantics<parallel>], iteration_bounds = array<i64: 2>, scalar_prefetch = 0 : i64, scratch_operands = 0 : i64, tpu.core_type = #tpu.core_type<tc>, window_params = [{transform_indices = @transform_0, window_bounds = array<i64: 4, 8, 8>}, {transform_indices = @transform_1, window_bounds = array<i64: 4, 8, 8>}, {transform_indices = @transform_2, window_bounds = array<i64: 4, 8, 8>}, {pipeline_mode = #tpu.pipeline_mode<synchronous>, transform_indices = @transform_3, window_bounds = array<i64: 1, 8, 8>}, {transform_indices = @transform_4, window_bounds = array<i64: 4, 8, 8>}]} {
    %c0 = arith.constant 0 : index
    %c0_0 = arith.constant 0 : index
    %c0_1 = arith.constant 0 : index
    %0 = vector.load %arg1[%c0, %c0_0, %c0_1] : memref<4x8x8xbf16, #tpu.memory_space<vmem>>, vector<4x8x8xbf16>
    %c0_2 = arith.constant 0 : index
    %c0_3 = arith.constant 0 : index
    %c0_4 = arith.constant 0 : index
    %1 = vector.load %arg2[%c0_2, %c0_3, %c0_4] : memref<4x8x8xbf16, #tpu.memory_space<vmem>>, vector<4x8x8xbf16>
    %c0_5 = arith.constant 0 : index
    %c0_6 = arith.constant 0 : index
    %c0_7 = arith.constant 0 : index
    %2 = vector.load %arg3[%c0_5, %c0_6, %c0_7] : memref<4x8x8xbf16, #tpu.memory_space<vmem>>, vector<4x8x8xbf16>
    "tpu.trace_start"() <{level = 10 : i32, message = "hqd,hkd->hqk"}> : () -> ()
    %cst = arith.constant dense<0.000000e+00> : vector<4x8x8xf32>
    %3 = tpu.matmul %0, %1, %cst {dimension_numbers = #tpu.dot_dimension_numbers<[2], [2], [1], [1], [0, 0, 0, 1, 1, 1], [0], [0]>} : vector<4x8x8xbf16>, vector<4x8x8xbf16>, vector<4x8x8xf32> -> vector<4x8x8xf32>
    "tpu.trace_stop"() : () -> ()
    %cst_8 = arith.constant 0.353553385 : f32
    %4 = vector.broadcast %cst_8 : f32 to vector<4x8x8xf32>
    %5 = arith.mulf %3, %4 : vector<4x8x8xf32>
    %c0_9 = arith.constant 0 : index
    %c0_10 = arith.constant 0 : index
    %c0_11 = arith.constant 0 : index
    %6 = vector.load %arg4[%c0_9, %c0_10, %c0_11] : memref<1x8x8xf32, #tpu.memory_space<vmem>>, vector<1x8x8xf32>
    %cst_12 = arith.constant 0.000000e+00 : f32
    %7 = vector.broadcast %cst_12 : f32 to vector<1x8x8xf32>
    %8 = arith.cmpf oeq, %6, %7 : vector<1x8x8xf32>
    %cst_13 = arith.constant -1.000000e+09 : f32
    %9 = vector.shape_cast %8 : vector<1x8x8xi1> to vector<1x8x8xi1>
    %10 = vector.broadcast %9 : vector<1x8x8xi1> to vector<4x8x8xi1>
    %11 = vector.broadcast %cst_13 : f32 to vector<4x8x8xf32>
    %12 = arith.select %10, %11, %5 : vector<4x8x8xi1>, vector<4x8x8xf32>
    %cst_14 = arith.constant dense<0xFF800000> : vector<4x8xf32>
    %13 = vector.multi_reduction <maximumf>, %12, %cst_14 [2] : vector<4x8x8xf32> to vector<4x8xf32>
    %14 = vector.shape_cast %13 : vector<4x8xf32> to vector<4x8x1xf32>
    %15 = vector.broadcast %14 : vector<4x8x1xf32> to vector<4x8x8xf32>
    %16 = arith.subf %12, %15 : vector<4x8x8xf32>
    %17 = math.exp %16 : vector<4x8x8xf32>
    %cst_15 = arith.constant dense<0.000000e+00> : vector<4x8xf32>
    %18 = vector.multi_reduction <add>, %17, %cst_15 [2] : vector<4x8x8xf32> to vector<4x8xf32>
    %19 = vector.shape_cast %18 : vector<4x8xf32> to vector<4x8x1xf32>
    %20 = tpu.reciprocal %19 {approx = true} : vector<4x8x1xf32> -> vector<4x8x1xf32>
    %21 = vector.broadcast %20 : vector<4x8x1xf32> to vector<4x8x8xf32>
    %22 = arith.mulf %17, %21 : vector<4x8x8xf32>
    %23 = arith.truncf %22 : vector<4x8x8xf32> to vector<4x8x8xbf16>
    "tpu.trace_start"() <{level = 10 : i32, message = "hqk,hkd->hqd"}> : () -> ()
    %cst_16 = arith.constant dense<0.000000e+00> : vector<4x8x8xf32>
    %24 = tpu.matmul %23, %2, %cst_16 {dimension_numbers = #tpu.dot_dimension_numbers<[2], [1], [1], [2], [0, 0, 0, 1, 1, 2], [0], [0]>} : vector<4x8x8xbf16>, vector<4x8x8xbf16>, vector<4x8x8xf32> -> vector<4x8x8xf32>
    "tpu.trace_stop"() : () -> ()
    %25 = arith.truncf %24 : vector<4x8x8xf32> to vector<4x8x8xbf16>
    %c0_17 = arith.constant 0 : index
    %c0_18 = arith.constant 0 : index
    %c0_19 = arith.constant 0 : index
    %26 = vector.load %arg5[%c0_17, %c0_18, %c0_19] : memref<4x8x8xbf16, #tpu.memory_space<vmem>>, vector<4x8x8xbf16>
    tpu.vector_store %arg5[%c0_17, %c0_18, %c0_19], %25 {strides = array<i32>} : memref<4x8x8xbf16, #tpu.memory_space<vmem>>, vector<4x8x8xbf16>,
    return
  }
  func.func @transform_0(%arg0: i32) -> (i32, i32, i32) {
    %c0_i32 = arith.constant 0 : i32
    %c0_i32_0 = arith.constant 0 : i32
    %c0_i32_1 = arith.constant 0 : i32
    return %arg0, %c0_i32, %c0_i32_0 : i32, i32, i32
  }
  func.func @transform_1(%arg0: i32) -> (i32, i32, i32) {
    %c0_i32 = arith.constant 0 : i32
    %c0_i32_0 = arith.constant 0 : i32
    %c0_i32_1 = arith.constant 0 : i32
    return %arg0, %c0_i32, %c0_i32_0 : i32, i32, i32
  }
  func.func @transform_2(%arg0: i32) -> (i32, i32, i32) {
    %c0_i32 = arith.constant 0 : i32
    %c0_i32_0 = arith.constant 0 : i32
    %c0_i32_1 = arith.constant 0 : i32
    return %arg0, %c0_i32, %c0_i32_0 : i32, i32, i32
  }
  func.func @transform_3(%arg0: i32) -> (i32, i32, i32) {
    %c0_i32 = arith.constant 0 : i32
    %c0_i32_0 = arith.constant 0 : i32
    %c0_i32_1 = arith.constant 0 : i32
    %c0_i32_2 = arith.constant 0 : i32
    return %c0_i32, %c0_i32_0, %c0_i32_1 : i32, i32, i32
  }
  func.func @transform_4(%arg0: i32) -> (i32, i32, i32) {
    %c0_i32 = arith.constant 0 : i32
    %c0_i32_0 = arith.constant 0 : i32
    %c0_i32_1 = arith.constant 0 : i32
    return %arg0, %c0_i32, %c0_i32_0 : i32, i32, i32
  }
}

module attributes {stable_mosaic.version = 11 : i64} {
  func.func @_linear_add_ln_kernel(%arg0: i32, %arg1: i32, %arg2: memref<16x32xbf16, #tpu.memory_space<vmem>>, %arg3: memref<32x32xbf16, #tpu.memory_space<vmem>>, %arg4: memref<1x32xf32, #tpu.memory_space<vmem>>, %arg5: memref<16x32xbf16, #tpu.memory_space<vmem>>, %arg6: memref<1x32xf32, #tpu.memory_space<vmem>>, %arg7: memref<1x32xf32, #tpu.memory_space<vmem>>, %arg8: memref<16x32xbf16, #tpu.memory_space<vmem>>, %arg9: memref<16x32xf32, #tpu.memory_space<vmem>>) attributes {dimension_semantics = [#tpu.dimension_semantics<parallel>, #tpu.dimension_semantics<arbitrary>], iteration_bounds = array<i64: 1, 1>, scalar_prefetch = 0 : i64, scratch_operands = 1 : i64, tpu.core_type = #tpu.core_type<tc>, window_params = [{transform_indices = @transform_0, window_bounds = array<i64: 16, 32>}, {transform_indices = @transform_1, window_bounds = array<i64: 32, 32>}, {pipeline_mode = #tpu.pipeline_mode<synchronous>, transform_indices = @transform_2, window_bounds = array<i64: 1, 32>}, {transform_indices = @transform_3, window_bounds = array<i64: 16, 32>}, {pipeline_mode = #tpu.pipeline_mode<synchronous>, transform_indices = @transform_4, window_bounds = array<i64: 1, 32>}, {pipeline_mode = #tpu.pipeline_mode<synchronous>, transform_indices = @transform_5, window_bounds = array<i64: 1, 32>}, {transform_indices = @transform_6, window_bounds = array<i64: 16, 32>}]} {
    %c0_i32 = arith.constant 0 : i32
    %0 = arith.cmpi eq, %arg1, %c0_i32 : i32
    %1 = arith.extui %0 : i1 to i32
    %c0_i32_0 = arith.constant 0 : i32
    %2 = arith.cmpi ne, %1, %c0_i32_0 : i32
    scf.if %2 {
      %cst_10 = arith.constant 0.000000e+00 : f32
      %12 = vector.broadcast %cst_10 : f32 to vector<16x32xf32>
      %c0_11 = arith.constant 0 : index
      %c0_12 = arith.constant 0 : index
      %13 = vector.load %arg9[%c0_11, %c0_12] : memref<16x32xf32, #tpu.memory_space<vmem>>, vector<16x32xf32>
      tpu.vector_store %arg9[%c0_11, %c0_12], %12 {strides = array<i32>} : memref<16x32xf32, #tpu.memory_space<vmem>>, vector<16x32xf32>,
    } else {
    }
    %c0 = arith.constant 0 : index
    %c0_1 = arith.constant 0 : index
    %3 = vector.load %arg9[%c0, %c0_1] : memref<16x32xf32, #tpu.memory_space<vmem>>, vector<16x32xf32>
    %c0_2 = arith.constant 0 : index
    %c0_3 = arith.constant 0 : index
    %4 = vector.load %arg2[%c0_2, %c0_3] : memref<16x32xbf16, #tpu.memory_space<vmem>>, vector<16x32xbf16>
    %c0_4 = arith.constant 0 : index
    %c0_5 = arith.constant 0 : index
    %5 = vector.load %arg3[%c0_4, %c0_5] : memref<32x32xbf16, #tpu.memory_space<vmem>>, vector<32x32xbf16>
    %cst = arith.constant dense<0.000000e+00> : vector<16x32xf32>
    %6 = tpu.matmul %4, %5, %cst {dimension_numbers = #tpu.dot_dimension_numbers<[1], [0], [0], [1], [0, 0, 1, 1], [], []>} : vector<16x32xbf16>, vector<32x32xbf16>, vector<16x32xf32> -> vector<16x32xf32>
    %7 = arith.addf %3, %6 : vector<16x32xf32>
    %c0_6 = arith.constant 0 : index
    %c0_7 = arith.constant 0 : index
    %8 = vector.load %arg9[%c0_6, %c0_7] : memref<16x32xf32, #tpu.memory_space<vmem>>, vector<16x32xf32>
    tpu.vector_store %arg9[%c0_6, %c0_7], %7 {strides = array<i32>} : memref<16x32xf32, #tpu.memory_space<vmem>>, vector<16x32xf32>,
    %c0_i32_8 = arith.constant 0 : i32
    %9 = arith.cmpi eq, %arg1, %c0_i32_8 : i32
    %10 = arith.extui %9 : i1 to i32
    %c0_i32_9 = arith.constant 0 : i32
    %11 = arith.cmpi ne, %10, %c0_i32_9 : i32
    scf.if %11 {
      %c0_10 = arith.constant 0 : index
      %c0_11 = arith.constant 0 : index
      %12 = vector.load %arg9[%c0_10, %c0_11] : memref<16x32xf32, #tpu.memory_space<vmem>>, vector<16x32xf32>
      %c0_12 = arith.constant 0 : index
      %c0_13 = arith.constant 0 : index
      %13 = vector.load %arg4[%c0_12, %c0_13] : memref<1x32xf32, #tpu.memory_space<vmem>>, vector<1x32xf32>
      %14 = vector.broadcast %13 : vector<1x32xf32> to vector<16x32xf32>
      %15 = arith.addf %12, %14 : vector<16x32xf32>
      %c0_14 = arith.constant 0 : index
      %c0_15 = arith.constant 0 : index
      %16 = vector.load %arg5[%c0_14, %c0_15] : memref<16x32xbf16, #tpu.memory_space<vmem>>, vector<16x32xbf16>
      %17 = arith.extf %16 : vector<16x32xbf16> to vector<16x32xf32>
      %18 = arith.addf %15, %17 : vector<16x32xf32>
      %cst_16 = arith.constant dense<0.000000e+00> : vector<16xf32>
      %19 = vector.multi_reduction <add>, %18, %cst_16 [1] : vector<16x32xf32> to vector<16xf32>
      %20 = vector.shape_cast %19 : vector<16xf32> to vector<16x1xf32>
      %cst_17 = arith.constant 3.200000e+01 : f32
      %21 = vector.broadcast %cst_17 : f32 to vector<16x1xf32>
      %22 = arith.divf %20, %21 : vector<16x1xf32>
      %23 = vector.broadcast %22 : vector<16x1xf32> to vector<16x32xf32>
      %24 = arith.subf %18, %23 : vector<16x32xf32>
      %25 = arith.mulf %24, %24 : vector<16x32xf32>
      %cst_18 = arith.constant dense<0.000000e+00> : vector<16xf32>
      %26 = vector.multi_reduction <add>, %25, %cst_18 [1] : vector<16x32xf32> to vector<16xf32>
      %27 = vector.shape_cast %26 : vector<16xf32> to vector<16x1xf32>
      %cst_19 = arith.constant 3.200000e+01 : f32
      %28 = vector.broadcast %cst_19 : f32 to vector<16x1xf32>
      %29 = arith.divf %27, %28 : vector<16x1xf32>
      %cst_20 = arith.constant 9.99999974E-6 : f32
      %30 = vector.broadcast %cst_20 : f32 to vector<16x1xf32>
      %31 = arith.addf %29, %30 : vector<16x1xf32>
      %32 = math.rsqrt %31 : vector<16x1xf32>
      %33 = vector.broadcast %32 : vector<16x1xf32> to vector<16x32xf32>
      %34 = arith.mulf %24, %33 : vector<16x32xf32>
      %c0_21 = arith.constant 0 : index
      %c0_22 = arith.constant 0 : index
      %35 = vector.load %arg6[%c0_21, %c0_22] : memref<1x32xf32, #tpu.memory_space<vmem>>, vector<1x32xf32>
      %36 = vector.broadcast %35 : vector<1x32xf32> to vector<16x32xf32>
      %37 = arith.mulf %34, %36 : vector<16x32xf32>
      %c0_23 = arith.constant 0 : index
      %c0_24 = arith.constant 0 : index
      %38 = vector.load %arg7[%c0_23, %c0_24] : memref<1x32xf32, #tpu.memory_space<vmem>>, vector<1x32xf32>
      %39 = vector.broadcast %38 : vector<1x32xf32> to vector<16x32xf32>
      %40 = arith.addf %37, %39 : vector<16x32xf32>
      %41 = arith.truncf %40 : vector<16x32xf32> to vector<16x32xbf16>
      %c0_25 = arith.constant 0 : index
      %c0_26 = arith.constant 0 : index
      %42 = vector.load %arg8[%c0_25, %c0_26] : memref<16x32xbf16, #tpu.memory_space<vmem>>, vector<16x32xbf16>
      tpu.vector_store %arg8[%c0_25, %c0_26], %41 {strides = array<i32>} : memref<16x32xbf16, #tpu.memory_space<vmem>>, vector<16x32xbf16>,
    } else {
    }
    return
  }
  func.func @transform_0(%arg0: i32, %arg1: i32) -> (i32, i32) {
    %c0_i32 = arith.constant 0 : i32
    return %arg0, %arg1 : i32, i32
  }
  func.func @transform_1(%arg0: i32, %arg1: i32) -> (i32, i32) {
    %c0_i32 = arith.constant 0 : i32
    %c0_i32_0 = arith.constant 0 : i32
    return %arg1, %c0_i32 : i32, i32
  }
  func.func @transform_2(%arg0: i32, %arg1: i32) -> (i32, i32) {
    %c0_i32 = arith.constant 0 : i32
    %c0_i32_0 = arith.constant 0 : i32
    %c0_i32_1 = arith.constant 0 : i32
    return %c0_i32, %c0_i32_0 : i32, i32
  }
  func.func @transform_3(%arg0: i32, %arg1: i32) -> (i32, i32) {
    %c0_i32 = arith.constant 0 : i32
    %c0_i32_0 = arith.constant 0 : i32
    return %arg0, %c0_i32 : i32, i32
  }
  func.func @transform_4(%arg0: i32, %arg1: i32) -> (i32, i32) {
    %c0_i32 = arith.constant 0 : i32
    %c0_i32_0 = arith.constant 0 : i32
    %c0_i32_1 = arith.constant 0 : i32
    return %c0_i32, %c0_i32_0 : i32, i32
  }
  func.func @transform_5(%arg0: i32, %arg1: i32) -> (i32, i32) {
    %c0_i32 = arith.constant 0 : i32
    %c0_i32_0 = arith.constant 0 : i32
    %c0_i32_1 = arith.constant 0 : i32
    return %c0_i32, %c0_i32_0 : i32, i32
  }
  func.func @transform_6(%arg0: i32, %arg1: i32) -> (i32, i32) {
    %c0_i32 = arith.constant 0 : i32
    %c0_i32_0 = arith.constant 0 : i32
    return %arg0, %c0_i32 : i32, i32
  }
}

module attributes {stable_mosaic.version = 11 : i64} {
  func.func @_ffn_kernel(%arg0: i32, %arg1: memref<16x32xbf16, #tpu.memory_space<vmem>>, %arg2: memref<32x128xbf16, #tpu.memory_space<vmem>>, %arg3: memref<1x128xf32, #tpu.memory_space<vmem>>, %arg4: memref<128x32xbf16, #tpu.memory_space<vmem>>, %arg5: memref<1x32xf32, #tpu.memory_space<vmem>>, %arg6: memref<16x32xbf16, #tpu.memory_space<vmem>>, %arg7: memref<1x32xf32, #tpu.memory_space<vmem>>, %arg8: memref<1x32xf32, #tpu.memory_space<vmem>>, %arg9: memref<16x32xbf16, #tpu.memory_space<vmem>>) attributes {dimension_semantics = [#tpu.dimension_semantics<parallel>], iteration_bounds = array<i64: 1>, scalar_prefetch = 0 : i64, scratch_operands = 0 : i64, tpu.core_type = #tpu.core_type<tc>, window_params = [{transform_indices = @transform_0, window_bounds = array<i64: 16, 32>}, {pipeline_mode = #tpu.pipeline_mode<synchronous>, transform_indices = @transform_1, window_bounds = array<i64: 32, 128>}, {pipeline_mode = #tpu.pipeline_mode<synchronous>, transform_indices = @transform_2, window_bounds = array<i64: 1, 128>}, {pipeline_mode = #tpu.pipeline_mode<synchronous>, transform_indices = @transform_3, window_bounds = array<i64: 128, 32>}, {pipeline_mode = #tpu.pipeline_mode<synchronous>, transform_indices = @transform_4, window_bounds = array<i64: 1, 32>}, {transform_indices = @transform_5, window_bounds = array<i64: 16, 32>}, {pipeline_mode = #tpu.pipeline_mode<synchronous>, transform_indices = @transform_6, window_bounds = array<i64: 1, 32>}, {pipeline_mode = #tpu.pipeline_mode<synchronous>, transform_indices = @transform_7, window_bounds = array<i64: 1, 32>}, {transform_indices = @transform_8, window_bounds = array<i64: 16, 32>}]} {
    %c0 = arith.constant 0 : index
    %c0_0 = arith.constant 0 : index
    %0 = vector.load %arg1[%c0, %c0_0] : memref<16x32xbf16, #tpu.memory_space<vmem>>, vector<16x32xbf16>
    %c0_1 = arith.constant 0 : index
    %c0_2 = arith.constant 0 : index
    %1 = vector.load %arg2[%c0_1, %c0_2] : memref<32x128xbf16, #tpu.memory_space<vmem>>, vector<32x128xbf16>
    %cst = arith.constant dense<0.000000e+00> : vector<16x128xf32>
    %2 = tpu.matmul %0, %1, %cst {dimension_numbers = #tpu.dot_dimension_numbers<[1], [0], [0], [1], [0, 0, 1, 1], [], []>} : vector<16x32xbf16>, vector<32x128xbf16>, vector<16x128xf32> -> vector<16x128xf32>
    %c0_3 = arith.constant 0 : index
    %c0_4 = arith.constant 0 : index
    %3 = vector.load %arg3[%c0_3, %c0_4] : memref<1x128xf32, #tpu.memory_space<vmem>>, vector<1x128xf32>
    %4 = vector.broadcast %3 : vector<1x128xf32> to vector<16x128xf32>
    %5 = arith.addf %2, %4 : vector<16x128xf32>
    %cst_5 = arith.constant 0.000000e+00 : f32
    %6 = vector.broadcast %cst_5 : f32 to vector<16x128xf32>
    %7 = arith.maximumf %5, %6 : vector<16x128xf32>
    %8 = arith.truncf %7 : vector<16x128xf32> to vector<16x128xbf16>
    %c0_6 = arith.constant 0 : index
    %c0_7 = arith.constant 0 : index
    %9 = vector.load %arg4[%c0_6, %c0_7] : memref<128x32xbf16, #tpu.memory_space<vmem>>, vector<128x32xbf16>
    %cst_8 = arith.constant dense<0.000000e+00> : vector<16x32xf32>
    %10 = tpu.matmul %8, %9, %cst_8 {dimension_numbers = #tpu.dot_dimension_numbers<[1], [0], [0], [1], [0, 0, 1, 1], [], []>} : vector<16x128xbf16>, vector<128x32xbf16>, vector<16x32xf32> -> vector<16x32xf32>
    %c0_9 = arith.constant 0 : index
    %c0_10 = arith.constant 0 : index
    %11 = vector.load %arg5[%c0_9, %c0_10] : memref<1x32xf32, #tpu.memory_space<vmem>>, vector<1x32xf32>
    %12 = vector.broadcast %11 : vector<1x32xf32> to vector<16x32xf32>
    %13 = arith.addf %10, %12 : vector<16x32xf32>
    %c0_11 = arith.constant 0 : index
    %c0_12 = arith.constant 0 : index
    %14 = vector.load %arg6[%c0_11, %c0_12] : memref<16x32xbf16, #tpu.memory_space<vmem>>, vector<16x32xbf16>
    %15 = arith.extf %14 : vector<16x32xbf16> to vector<16x32xf32>
    %16 = arith.addf %13, %15 : vector<16x32xf32>
    %cst_13 = arith.constant dense<0.000000e+00> : vector<16xf32>
    %17 = vector.multi_reduction <add>, %16, %cst_13 [1] : vector<16x32xf32> to vector<16xf32>
    %18 = vector.shape_cast %17 : vector<16xf32> to vector<16x1xf32>
    %cst_14 = arith.constant 3.200000e+01 : f32
    %19 = vector.broadcast %cst_14 : f32 to vector<16x1xf32>
    %20 = arith.divf %18, %19 : vector<16x1xf32>
    %21 = vector.broadcast %20 : vector<16x1xf32> to vector<16x32xf32>
    %22 = arith.subf %16, %21 : vector<16x32xf32>
    %23 = arith.mulf %22, %22 : vector<16x32xf32>
    %cst_15 = arith.constant dense<0.000000e+00> : vector<16xf32>
    %24 = vector.multi_reduction <add>, %23, %cst_15 [1] : vector<16x32xf32> to vector<16xf32>
    %25 = vector.shape_cast %24 : vector<16xf32> to vector<16x1xf32>
    %cst_16 = arith.constant 3.200000e+01 : f32
    %26 = vector.broadcast %cst_16 : f32 to vector<16x1xf32>
    %27 = arith.divf %25, %26 : vector<16x1xf32>
    %cst_17 = arith.constant 9.99999974E-6 : f32
    %28 = vector.broadcast %cst_17 : f32 to vector<16x1xf32>
    %29 = arith.addf %27, %28 : vector<16x1xf32>
    %30 = math.rsqrt %29 : vector<16x1xf32>
    %31 = vector.broadcast %30 : vector<16x1xf32> to vector<16x32xf32>
    %32 = arith.mulf %22, %31 : vector<16x32xf32>
    %c0_18 = arith.constant 0 : index
    %c0_19 = arith.constant 0 : index
    %33 = vector.load %arg7[%c0_18, %c0_19] : memref<1x32xf32, #tpu.memory_space<vmem>>, vector<1x32xf32>
    %34 = vector.broadcast %33 : vector<1x32xf32> to vector<16x32xf32>
    %35 = arith.mulf %32, %34 : vector<16x32xf32>
    %c0_20 = arith.constant 0 : index
    %c0_21 = arith.constant 0 : index
    %36 = vector.load %arg8[%c0_20, %c0_21] : memref<1x32xf32, #tpu.memory_space<vmem>>, vector<1x32xf32>
    %37 = vector.broadcast %36 : vector<1x32xf32> to vector<16x32xf32>
    %38 = arith.addf %35, %37 : vector<16x32xf32>
    %39 = arith.truncf %38 : vector<16x32xf32> to vector<16x32xbf16>
    %c0_22 = arith.constant 0 : index
    %c0_23 = arith.constant 0 : index
    %40 = vector.load %arg9[%c0_22, %c0_23] : memref<16x32xbf16, #tpu.memory_space<vmem>>, vector<16x32xbf16>
    tpu.vector_store %arg9[%c0_22, %c0_23], %39 {strides = array<i32>} : memref<16x32xbf16, #tpu.memory_space<vmem>>, vector<16x32xbf16>,
    return
  }
  func.func @transform_0(%arg0: i32) -> (i32, i32) {
    %c0_i32 = arith.constant 0 : i32
    %c0_i32_0 = arith.constant 0 : i32
    return %arg0, %c0_i32 : i32, i32
  }
  func.func @transform_1(%arg0: i32) -> (i32, i32) {
    %c0_i32 = arith.constant 0 : i32
    %c0_i32_0 = arith.constant 0 : i32
    %c0_i32_1 = arith.constant 0 : i32
    return %c0_i32, %c0_i32_0 : i32, i32
  }
  func.func @transform_2(%arg0: i32) -> (i32, i32) {
    %c0_i32 = arith.constant 0 : i32
    %c0_i32_0 = arith.constant 0 : i32
    %c0_i32_1 = arith.constant 0 : i32
    return %c0_i32, %c0_i32_0 : i32, i32
  }
  func.func @transform_3(%arg0: i32) -> (i32, i32) {
    %c0_i32 = arith.constant 0 : i32
    %c0_i32_0 = arith.constant 0 : i32
    %c0_i32_1 = arith.constant 0 : i32
    return %c0_i32, %c0_i32_0 : i32, i32
  }
  func.func @transform_4(%arg0: i32) -> (i32, i32) {
    %c0_i32 = arith.constant 0 : i32
    %c0_i32_0 = arith.constant 0 : i32
    %c0_i32_1 = arith.constant 0 : i32
    return %c0_i32, %c0_i32_0 : i32, i32
  }
  func.func @transform_5(%arg0: i32) -> (i32, i32) {
    %c0_i32 = arith.constant 0 : i32
    %c0_i32_0 = arith.constant 0 : i32
    return %arg0, %c0_i32 : i32, i32
  }
  func.func @transform_6(%arg0: i32) -> (i32, i32) {
    %c0_i32 = arith.constant 0 : i32
    %c0_i32_0 = arith.constant 0 : i32
    %c0_i32_1 = arith.constant 0 : i32
    return %c0_i32, %c0_i32_0 : i32, i32
  }
  func.func @transform_7(%arg0: i32) -> (i32, i32) {
    %c0_i32 = arith.constant 0 : i32
    %c0_i32_0 = arith.constant 0 : i32
    %c0_i32_1 = arith.constant 0 : i32
    return %c0_i32, %c0_i32_0 : i32, i32
  }
  func.func @transform_8(%arg0: i32) -> (i32, i32) {
    %c0_i32 = arith.constant 0 : i32
    %c0_i32_0 = arith.constant 0 : i32
    return %arg0, %c0_i32 : i32, i32
  }
}

module attributes {stable_mosaic.version = 11 : i64} {
  func.func @_linear_softmax_kernel(%arg0: i32, %arg1: i32, %arg2: memref<16x32xbf16, #tpu.memory_space<vmem>>, %arg3: memref<32x128xbf16, #tpu.memory_space<vmem>>, %arg4: memref<1x128xf32, #tpu.memory_space<vmem>>, %arg5: memref<16x128xf32, #tpu.memory_space<vmem>>, %arg6: memref<16x128xf32, #tpu.memory_space<vmem>>) attributes {dimension_semantics = [#tpu.dimension_semantics<parallel>, #tpu.dimension_semantics<arbitrary>], iteration_bounds = array<i64: 1, 1>, scalar_prefetch = 0 : i64, scratch_operands = 1 : i64, tpu.core_type = #tpu.core_type<tc>, window_params = [{transform_indices = @transform_0, window_bounds = array<i64: 16, 32>}, {transform_indices = @transform_1, window_bounds = array<i64: 32, 128>}, {pipeline_mode = #tpu.pipeline_mode<synchronous>, transform_indices = @transform_2, window_bounds = array<i64: 1, 128>}, {transform_indices = @transform_3, window_bounds = array<i64: 16, 128>}]} {
    %c0_i32 = arith.constant 0 : i32
    %0 = arith.cmpi eq, %arg1, %c0_i32 : i32
    %1 = arith.extui %0 : i1 to i32
    %c0_i32_0 = arith.constant 0 : i32
    %2 = arith.cmpi ne, %1, %c0_i32_0 : i32
    scf.if %2 {
      %cst_10 = arith.constant 0.000000e+00 : f32
      %12 = vector.broadcast %cst_10 : f32 to vector<16x128xf32>
      %c0_11 = arith.constant 0 : index
      %c0_12 = arith.constant 0 : index
      %13 = vector.load %arg6[%c0_11, %c0_12] : memref<16x128xf32, #tpu.memory_space<vmem>>, vector<16x128xf32>
      tpu.vector_store %arg6[%c0_11, %c0_12], %12 {strides = array<i32>} : memref<16x128xf32, #tpu.memory_space<vmem>>, vector<16x128xf32>,
    } else {
    }
    %c0 = arith.constant 0 : index
    %c0_1 = arith.constant 0 : index
    %3 = vector.load %arg6[%c0, %c0_1] : memref<16x128xf32, #tpu.memory_space<vmem>>, vector<16x128xf32>
    %c0_2 = arith.constant 0 : index
    %c0_3 = arith.constant 0 : index
    %4 = vector.load %arg2[%c0_2, %c0_3] : memref<16x32xbf16, #tpu.memory_space<vmem>>, vector<16x32xbf16>
    %c0_4 = arith.constant 0 : index
    %c0_5 = arith.constant 0 : index
    %5 = vector.load %arg3[%c0_4, %c0_5] : memref<32x128xbf16, #tpu.memory_space<vmem>>, vector<32x128xbf16>
    %cst = arith.constant dense<0.000000e+00> : vector<16x128xf32>
    %6 = tpu.matmul %4, %5, %cst {dimension_numbers = #tpu.dot_dimension_numbers<[1], [0], [0], [1], [0, 0, 1, 1], [], []>} : vector<16x32xbf16>, vector<32x128xbf16>, vector<16x128xf32> -> vector<16x128xf32>
    %7 = arith.addf %3, %6 : vector<16x128xf32>
    %c0_6 = arith.constant 0 : index
    %c0_7 = arith.constant 0 : index
    %8 = vector.load %arg6[%c0_6, %c0_7] : memref<16x128xf32, #tpu.memory_space<vmem>>, vector<16x128xf32>
    tpu.vector_store %arg6[%c0_6, %c0_7], %7 {strides = array<i32>} : memref<16x128xf32, #tpu.memory_space<vmem>>, vector<16x128xf32>,
    %c0_i32_8 = arith.constant 0 : i32
    %9 = arith.cmpi eq, %arg1, %c0_i32_8 : i32
    %10 = arith.extui %9 : i1 to i32
    %c0_i32_9 = arith.constant 0 : i32
    %11 = arith.cmpi ne, %10, %c0_i32_9 : i32
    scf.if %11 {
      %c0_10 = arith.constant 0 : index
      %c0_11 = arith.constant 0 : index
      %12 = vector.load %arg6[%c0_10, %c0_11] : memref<16x128xf32, #tpu.memory_space<vmem>>, vector<16x128xf32>
      %c0_12 = arith.constant 0 : index
      %c0_13 = arith.constant 0 : index
      %13 = vector.load %arg4[%c0_12, %c0_13] : memref<1x128xf32, #tpu.memory_space<vmem>>, vector<1x128xf32>
      %14 = vector.broadcast %13 : vector<1x128xf32> to vector<16x128xf32>
      %15 = arith.addf %12, %14 : vector<16x128xf32>
      %16 = tpu.iota {dimensions = array<i32: 1>} : vector<16x128xi32>
      %c50_i32 = arith.constant 50 : i32
      %17 = vector.broadcast %c50_i32 : i32 to vector<16x128xi32>
      %18 = arith.cmpi slt, %16, %17 : vector<16x128xi32>
      %cst_14 = arith.constant -1.000000e+30 : f32
      %19 = vector.broadcast %cst_14 : f32 to vector<16x128xf32>
      %20 = arith.select %18, %15, %19 : vector<16x128xi1>, vector<16x128xf32>
      %cst_15 = arith.constant dense<0xFF800000> : vector<16xf32>
      %21 = vector.multi_reduction <maximumf>, %20, %cst_15 [1] : vector<16x128xf32> to vector<16xf32>
      %22 = vector.shape_cast %21 : vector<16xf32> to vector<16x1xf32>
      %23 = vector.broadcast %22 : vector<16x1xf32> to vector<16x128xf32>
      %24 = arith.subf %20, %23 : vector<16x128xf32>
      %25 = math.exp %24 : vector<16x128xf32>
      %cst_16 = arith.constant dense<0.000000e+00> : vector<16xf32>
      %26 = vector.multi_reduction <add>, %25, %cst_16 [1] : vector<16x128xf32> to vector<16xf32>
      %27 = vector.shape_cast %26 : vector<16xf32> to vector<16x1xf32>
      %28 = vector.broadcast %27 : vector<16x1xf32> to vector<16x128xf32>
      %29 = arith.divf %25, %28 : vector<16x128xf32>
      %c0_17 = arith.constant 0 : index
      %c0_18 = arith.constant 0 : index
      %30 = vector.load %arg5[%c0_17, %c0_18] : memref<16x128xf32, #tpu.memory_space<vmem>>, vector<16x128xf32>
      tpu.vector_store %arg5[%c0_17, %c0_18], %29 {strides = array<i32>} : memref<16x128xf32, #tpu.memory_space<vmem>>, vector<16x128xf32>,
    } else {
    }
    return
  }
  func.func @transform_0(%arg0: i32, %arg1: i32) -> (i32, i32) {
    %c0_i32 = arith.constant 0 : i32
    return %arg0, %arg1 : i32, i32
  }
  func.func @transform_1(%arg0: i32, %arg1: i32) -> (i32, i32) {
    %c0_i32 = arith.constant 0 : i32
    %c0_i32_0 = arith.constant 0 : i32
    return %arg1, %c0_i32 : i32, i32
  }
  func.func @transform_2(%arg0: i32, %arg1: i32) -> (i32, i32) {
    %c0_i32 = arith.constant 0 : i32
    %c0_i32_0 = arith.constant 0 : i32
    %c0_i32_1 = arith.constant 0 : i32
    return %c0_i32, %c0_i32_0 : i32, i32
  }
  func.func @transform_3(%arg0: i32, %arg1: i32) -> (i32, i32) {
    %c0_i32 = arith.constant 0 : i32
    %c0_i32_0 = arith.constant 0 : i32
    return %arg0, %c0_i32 : i32, i32
  }
}

</mosaic_0001>

<llo_original>
// kernel: gpt_forward.17
$region0: #{gpt_forward.17}
  #allocation0 [shape = 'u32[]', space=smem, size = 0x4, offset = 0x4, fixed_abs, tag = 'smem constant byte address 0x4 - core index']
  #allocation1 [shape = 'u32[144,128]{1,0:T(1,128)}', space=vmem, size = 0x12000, scoped, tag = 'internal scratch']
  #allocation2 [shape = 'f32[16,32]{1,0:T(8,128)}', space=vmem, size = 0x2000, scoped, tag = 'scratch operand']
  %s0 = inlined_call_operand.vmem [shape: bf16[16,32], index: 0, kind: input, shape index: {}]
  %s1 = inlined_call_operand.vmem [shape: bf16[32,32], index: 1, kind: input, shape index: {}]
  %s2 = inlined_call_operand.vmem [shape: f32[1,32], index: 2, kind: input, shape index: {}]
  %s3 = inlined_call_operand.vmem [shape: bf16[16,32], index: 3, kind: input, shape index: {}]
  %s4 = inlined_call_operand.vmem [shape: f32[1,32], index: 4, kind: input, shape index: {}]
  %s5 = inlined_call_operand.vmem [shape: f32[1,32], index: 5, kind: input, shape index: {}]
  %s6 = inlined_call_operand.vmem [shape: bf16[16,32], index: 6, kind: output, shape index: {}]
  %s7 = sld [smem:[#allocation0]]
  $region42: #{gpt_forward.17} parent=0
    _
  %s9 = ssub.s32 1, %s7
  %s10 = scalar_select 0, %s9, %s7
  // Predicated region
  $region2: #{gpt_forward.17} parent=0 // pred_check
    _
  $region3: #{gpt_forward.17} parent=0 // pred_check_branch
    %12 = sbr.rel (0) target = $region5
  $region4: #{gpt_forward.17} parent=0 // pred_region
    _
  $region5: #{gpt_forward.17} parent=0 // pred_fallthru
    _
  // Predicated region
  $region6: #{gpt_forward.17} parent=0 // pred_check
    _
  $region7: #{gpt_forward.17} parent=0 // pred_check_branch
    %14 = sbr.rel (0) target = $region9
  $region8: #{gpt_forward.17} parent=0 // pred_region
    _
  $region9: #{gpt_forward.17} parent=0 // pred_fallthru
    _
  // Predicated region
  $region10: #{gpt_forward.17} parent=0 // pred_check
    _
  $region11: #{gpt_forward.17} parent=0 // pred_check_branch
    %16 = sbr.rel (0) target = $region13
  $region12: #{gpt_forward.17} parent=0 // pred_region
    _
  $region13: #{gpt_forward.17} parent=0 // pred_fallthru
    _
  // Predicated region
  $region14: #{gpt_forward.17} parent=0 // pred_check
    _
  $region15: #{gpt_forward.17} parent=0 // pred_check_branch
    %18 = sbr.rel (0) target = $region17
  $region16: #{gpt_forward.17} parent=0 // pred_region
    _
  $region17: #{gpt_forward.17} parent=0 // pred_fallthru
    _
  // Predicated region
  $region18: #{gpt_forward.17} parent=0 // pred_check
    _
  $region19: #{gpt_forward.17} parent=0 // pred_check_branch
    %20 = sbr.rel (0) target = $region21
  $region20: #{gpt_forward.17} parent=0 // pred_region
    _
  $region21: #{gpt_forward.17} parent=0 // pred_fallthru
    _
  // Predicated region
  $region22: #{gpt_forward.17} parent=0 // pred_check
    _
  $region23: #{gpt_forward.17} parent=0 // pred_check_branch
    %22 = sbr.rel (0) target = $region25
  $region24: #{gpt_forward.17} parent=0 // pred_region
    _
  $region25: #{gpt_forward.17} parent=0 // pred_fallthru
    _
  %p24 = scmp.eq.s32.totalorder 0, 0
  // Predicated region
  $region26: #{gpt_forward.17} parent=0 // pred_check
    %p25 = pneg %p24
  $region27: #{gpt_forward.17} parent=0 // pred_check_branch
    %27 = sbr.rel (%p25) target = $region29
  $region28: #{gpt_forward.17} parent=0 // pred_region
    %vm28 = vcmask 261120
    %29 = vst.msk [vmem:[#allocation2] sm:$0xff] %vm28, 0.0
    %30 = vst.msk [vmem:[#allocation2 + $0x8] sm:$0xff] %vm28, 0.0
  $region29: #{gpt_forward.17} parent=0 // pred_fallthru
    _
  %v31 = vld [vmem:[#allocation2] sm:$0xff]
  %v32 = vld [vmem:[#allocation2 + $0x8] sm:$0xff]
  %v33 = vld [vmem:[%s0] sm:$0xf]
  %v34 = vld [vmem:[%s0 + $0x4] sm:$0xf]
  %v35 = vld [vmem:[%s1] sm:$0xf]
  %v36 = vld [vmem:[%s1 + $0x4] sm:$0xf]
  %v37 = vld [vmem:[%s1 + $0x8] sm:$0xf]
  %v38 = vld [vmem:[%s1 + $0xc] sm:$0xf]
  %v41 = vunpack.c.l.b16 %v33
  %v42 = vunpack.c.l.b16 %v34
  %v43 = vpack.c.b16 %v42, %v41
  %v48 = vunpack.c.l.b16 %v35
  %v49 = vunpack.c.l.b16 %v36
  %v50 = vunpack.c.l.b16 %v37
  %v51 = vunpack.c.l.b16 %v38
  %v52 = vpack.c.b16 %v49, %v48
  %v53 = vpack.c.b16 %v51, %v50
  %vm56 = vcmask 261120
  %v58 = vsel %vm56, %v43, 0
  %60 = vmatprep.subr.bf16.mxu0 0
  %61 = vmatpush1.bf16.msra.mxu0 %v52
  %62 = vmatprep.subr.bf16.mxu0 0
  %63 = vmatpush1.bf16.msra.mxu0 %v53
  %64 = vmatprep.subr.bf16.mxu0 0
  %65 = vmatpush1.bf16.msra.mxu0 0
  %66 = vmatprep.subr.bf16.mxu0 0
  %67 = vmatpush1.bf16.msra.mxu0 0
  %68 = vmatprep.subr.bf16.mxu0 0
  %69 = vmatpush1.bf16.msra.mxu0 0
  %70 = vmatprep.subr.bf16.mxu0 0
  %71 = vmatpush1.bf16.msra.mxu0 0
  %72 = vmatprep.subr.bf16.mxu0 0
  %73 = vmatpush1.bf16.msra.mxu0 0
  %74 = vmatprep.subr.bf16.mxu0 0
  %75 = vmatpush1.bf16.msra.mxu0 0
  %76 = vmatprep.subr.bf16.mxu0 0
  %77 = vmatpush1.bf16.msra.mxu0 0
  %78 = vmatprep.subr.bf16.mxu0 0
  %79 = vmatpush1.bf16.msra.mxu0 0
  %80 = vmatprep.subr.bf16.mxu0 0
  %81 = vmatpush1.bf16.msra.mxu0 0
  %82 = vmatprep.subr.bf16.mxu0 0
  %83 = vmatpush1.bf16.msra.mxu0 0
  %84 = vmatprep.subr.bf16.mxu0 0
  %85 = vmatpush1.bf16.msra.mxu0 0
  %86 = vmatprep.subr.bf16.mxu0 0
  %87 = vmatpush1.bf16.msra.mxu0 0
  %88 = vmatprep.subr.bf16.mxu0 0
  %89 = vmatpush1.bf16.msra.mxu0 0
  %90 = vmatprep.subr.bf16.mxu0 0
  %91 = vmatpush1.bf16.msra.mxu0 0
  %92 = vmatprep.mubr.bf16.mxu0 0
  %93 = vmatmul.mubr.bf16.gmra.mrb[0].mxu0 %v58
  %v94 = vpop.f32.mrb[0].mxu0
  %v95 = vadd.f32 0.0, %v94
  %v96 = vpop.f32.mrb[0].mxu0
  %v97 = vpop.f32.mrb[0].mxu0
  %v98 = vadd.f32 0.0, %v97
  %v99 = vpop.f32.mrb[0].mxu0
  %100 = vdwg.mxu0
  %v101 = vadd.f32 %v31, %v95
  %v102 = vadd.f32 %v32, %v98
  %103 = vst.msk [vmem:[#allocation2] sm:$0xff] %vm56, %v101
  %104 = vst.msk [vmem:[#allocation2 + $0x8] sm:$0xff] %vm56, %v102
  // Predicated region
  $region30: #{gpt_forward.17} parent=0 // pred_check
    %p105 = pneg %p24
  $region31: #{gpt_forward.17} parent=0 // pred_check_branch
    %107 = sbr.rel (%p105) target = $region33
  $region32: #{gpt_forward.17} parent=0 // pred_region
    %v108 = vld [vmem:[#allocation2] sm:$0xff]
    %v109 = vld [vmem:[#allocation2 + $0x8] sm:$0xff]
    %v110 = vld [vmem:[%s2] sm:$0x1]
    %v112 = vlaneseq
    %v113 = vshrl.u32 %v112, 7
    %v114 = vsub.s32 0, %v113
    %v115 = vrot.slane %v110, %v114
    %v117 = vadd.f32 %v108, %v115
    %v118 = vadd.f32 %v109, %v115
    %v119 = vld [vmem:[%s3] sm:$0xf]
    %v120 = vld [vmem:[%s3 + $0x4] sm:$0xf]
    %v121 = vunpack.c.l.bf16 %v119
    %v122 = vunpack.c.l.bf16 %v120
    %v123 = vadd.f32 %v117, %v121
    %v124 = vadd.f32 %v118, %v122
    %v125 = vsel %vm56, %v123, 0.0
    %126 = vadd.xlane.f32.xlu0 %v125
    %v127 = vpop.xlane.xlu0 %126
    %v128 = vsel %vm56, %v124, 0.0
    %129 = vadd.xlane.f32.xlu0 %v128
    %v130 = vpop.xlane.xlu0 %129
    %v131 = vrcp.pop 32.0
    %v132 = vmul.f32 %v127, %v131
    %v133 = vmul.f32 %v130, %v131
    %v134 = vsub.f32 %v123, %v132
    %v135 = vsub.f32 %v124, %v133
    %v136 = vmul.f32 %v134, %v134
    %v137 = vmul.f32 %v135, %v135
    %v138 = vsel %vm56, %v136, 0.0
    %139 = vadd.xlane.f32.xlu0 %v138
    %v140 = vpop.xlane.xlu0 %139
    %v141 = vsel %vm56, %v137, 0.0
    %142 = vadd.xlane.f32.xlu0 %v141
    %v143 = vpop.xlane.xlu0 %142
    %v144 = vmul.f32 %v140, %v131
    %v145 = vmul.f32 %v143, %v131
    %v146 = vadd.f32 %v144, 1e-05
    %v147 = vadd.f32 %v145, 1e-05
    %v148 = vrsqrt.pop %v146
    %v149 = vrsqrt.pop %v147
    %v150 = vmul.f32 %v134, %v148
    %v151 = vmul.f32 %v135, %v149
    %v152 = vld [vmem:[%s4] sm:$0x1]
    %v154 = vlaneseq
    %v155 = vshrl.u32 %v154, 7
    %v156 = vsub.s32 0, %v155
    %v157 = vrot.slane %v152, %v156
    %v159 = vmul.f32 %v150, %v157
    %v160 = vmul.f32 %v151, %v157
    %v161 = vld [vmem:[%s5] sm:$0x1]
    %v163 = vlaneseq
    %v164 = vshrl.u32 %v163, 7
    %v165 = vsub.s32 0, %v164
    %v166 = vrot.slane %v161, %v165
    %v168 = vadd.f32 %v159, %v166
    %v169 = vadd.f32 %v160, %v166
    %v170 = vpack.c.bf16 %v169, %v168
    %v172 = vunpack.c.l.b16 %v170
    %v173 = vunpack.c.h.b16 %v170
    %v174 = vpack.c.b16 %v172, %v172
    %v175 = vpack.c.b16 %v173, %v173
    %vm178 = vcmask 257024
    %179 = vst.msk [vmem:[%s6] sm:$0xf] %vm178, %v174
    %180 = vst.msk [vmem:[%s6 + $0x4] sm:$0xf] %vm178, %v175
  $region33: #{gpt_forward.17} parent=0 // pred_fallthru
    _
  // Predicated region
  $region34: #{gpt_forward.17} parent=0 // pred_check
    _
  $region35: #{gpt_forward.17} parent=0 // pred_check_branch
    %182 = sbr.rel (0) target = $region37
  $region36: #{gpt_forward.17} parent=0 // pred_region
    _
  $region37: #{gpt_forward.17} parent=0 // pred_fallthru
    _
  // Predicated region
  $region38: #{gpt_forward.17} parent=0 // pred_check
    _
  $region39: #{gpt_forward.17} parent=0 // pred_check_branch
    %184 = sbr.rel (0) target = $region41
  $region40: #{gpt_forward.17} parent=0 // pred_region
    _
  $region41: #{gpt_forward.17} parent=0 // pred_fallthru
    _

// kernel: gpt_forward.15
$region0: #{gpt_forward.15}
  #allocation0 [shape = 'u32[]', space=smem, size = 0x4, offset = 0x4, fixed_abs, tag = 'smem constant byte address 0x4 - core index']
  #allocation1 [shape = 'u32[144,128]{1,0:T(1,128)}', space=vmem, size = 0x12000, scoped, tag = 'internal scratch']
  #allocation2 [shape = 'f32[16,96]{1,0:T(8,128)}', space=vmem, size = 0x2000, scoped, tag = 'scratch operand']
  %s0 = inlined_call_operand.vmem [shape: bf16[16,32], index: 0, kind: input, shape index: {}]
  %s1 = inlined_call_operand.vmem [shape: bf16[32,96], index: 1, kind: input, shape index: {}]
  %s2 = inlined_call_operand.vmem [shape: f32[1,96], index: 2, kind: input, shape index: {}]
  %s3 = inlined_call_operand.vmem [shape: bf16[16,96], index: 3, kind: output, shape index: {}]
  %s4 = sld [smem:[#allocation0]]
  $region30: #{gpt_forward.15} parent=0
    _
  %s6 = ssub.s32 1, %s4
  %s7 = scalar_select 0, %s6, %s4
  // Predicated region
  $region2: #{gpt_forward.15} parent=0 // pred_check
    _
  $region3: #{gpt_forward.15} parent=0 // pred_check_branch
    %9 = sbr.rel (0) target = $region5
  $region4: #{gpt_forward.15} parent=0 // pred_region
    _
  $region5: #{gpt_forward.15} parent=0 // pred_fallthru
    _
  // Predicated region
  $region6: #{gpt_forward.15} parent=0 // pred_check
    _
  $region7: #{gpt_forward.15} parent=0 // pred_check_branch
    %11 = sbr.rel (0) target = $region9
  $region8: #{gpt_forward.15} parent=0 // pred_region
    _
  $region9: #{gpt_forward.15} parent=0 // pred_fallthru
    _
  // Predicated region
  $region10: #{gpt_forward.15} parent=0 // pred_check
    _
  $region11: #{gpt_forward.15} parent=0 // pred_check_branch
    %13 = sbr.rel (0) target = $region13
  $region12: #{gpt_forward.15} parent=0 // pred_region
    _
  $region13: #{gpt_forward.15} parent=0 // pred_fallthru
    _
  %p15 = scmp.eq.s32.totalorder 0, 0
  // Predicated region
  $region14: #{gpt_forward.15} parent=0 // pred_check
    %p16 = pneg %p15
  $region15: #{gpt_forward.15} parent=0 // pred_check_branch
    %18 = sbr.rel (%p16) target = $region17
  $region16: #{gpt_forward.15} parent=0 // pred_region
    %vm19 = vcmask 785408
    %20 = vst.msk [vmem:[#allocation2] sm:$0xff] %vm19, 0.0
    %21 = vst.msk [vmem:[#allocation2 + $0x8] sm:$0xff] %vm19, 0.0
  $region17: #{gpt_forward.15} parent=0 // pred_fallthru
    _
  %v22 = vld [vmem:[#allocation2] sm:$0xff]
  %v23 = vld [vmem:[#allocation2 + $0x8] sm:$0xff]
  %v24 = vld [vmem:[%s0] sm:$0xf]
  %v25 = vld [vmem:[%s0 + $0x4] sm:$0xf]
  %v26 = vld [vmem:[%s1] sm:$0xf]
  %v27 = vld [vmem:[%s1 + $0x4] sm:$0xf]
  %v28 = vld [vmem:[%s1 + $0x8] sm:$0xf]
  %v29 = vld [vmem:[%s1 + $0xc] sm:$0xf]
  %v32 = vunpack.c.l.b16 %v24
  %v33 = vunpack.c.l.b16 %v25
  %v34 = vpack.c.b16 %v33, %v32
  %v39 = vunpack.c.l.b16 %v26
  %v40 = vunpack.c.l.b16 %v27
  %v41 = vunpack.c.l.b16 %v28
  %v42 = vunpack.c.l.b16 %v29
  %v43 = vpack.c.b16 %v40, %v39
  %v44 = vpack.c.b16 %v42, %v41
  %vm47 = vcmask 261120
  %v49 = vsel %vm47, %v34, 0
  %51 = vmatprep.subr.bf16.mxu0 0
  %52 = vmatpush1.bf16.msra.mxu0 %v43
  %53 = vmatprep.subr.bf16.mxu0 0
  %54 = vmatpush1.bf16.msra.mxu0 %v44
  %55 = vmatprep.subr.bf16.mxu0 0
  %56 = vmatpush1.bf16.msra.mxu0 0
  %57 = vmatprep.subr.bf16.mxu0 0
  %58 = vmatpush1.bf16.msra.mxu0 0
  %59 = vmatprep.subr.bf16.mxu0 0
  %60 = vmatpush1.bf16.msra.mxu0 0
  %61 = vmatprep.subr.bf16.mxu0 0
  %62 = vmatpush1.bf16.msra.mxu0 0
  %63 = vmatprep.subr.bf16.mxu0 0
  %64 = vmatpush1.bf16.msra.mxu0 0
  %65 = vmatprep.subr.bf16.mxu0 0
  %66 = vmatpush1.bf16.msra.mxu0 0
  %67 = vmatprep.subr.bf16.mxu0 0
  %68 = vmatpush1.bf16.msra.mxu0 0
  %69 = vmatprep.subr.bf16.mxu0 0
  %70 = vmatpush1.bf16.msra.mxu0 0
  %71 = vmatprep.subr.bf16.mxu0 0
  %72 = vmatpush1.bf16.msra.mxu0 0
  %73 = vmatprep.subr.bf16.mxu0 0
  %74 = vmatpush1.bf16.msra.mxu0 0
  %75 = vmatprep.subr.bf16.mxu0 0
  %76 = vmatpush1.bf16.msra.mxu0 0
  %77 = vmatprep.subr.bf16.mxu0 0
  %78 = vmatpush1.bf16.msra.mxu0 0
  %79 = vmatprep.subr.bf16.mxu0 0
  %80 = vmatpush1.bf16.msra.mxu0 0
  %81 = vmatprep.subr.bf16.mxu0 0
  %82 = vmatpush1.bf16.msra.mxu0 0
  %83 = vmatprep.mubr.bf16.mxu0 0
  %84 = vmatmul.mubr.bf16.gmra.mrb[0].mxu0 %v49
  %v85 = vpop.f32.mrb[0].mxu0
  %v86 = vadd.f32 0.0, %v85
  %v87 = vpop.f32.mrb[0].mxu0
  %v88 = vpop.f32.mrb[0].mxu0
  %v89 = vadd.f32 0.0, %v88
  %v90 = vpop.f32.mrb[0].mxu0
  %91 = vdwg.mxu0
  %v92 = vadd.f32 %v22, %v86
  %v93 = vadd.f32 %v23, %v89
  %vm94 = vcmask 785408
  %95 = vst.msk [vmem:[#allocation2] sm:$0xff] %vm94, %v92
  %96 = vst.msk [vmem:[#allocation2 + $0x8] sm:$0xff] %vm94, %v93
  // Predicated region
  $region18: #{gpt_forward.15} parent=0 // pred_check
    %p97 = pneg %p15
  $region19: #{gpt_forward.15} parent=0 // pred_check_branch
    %99 = sbr.rel (%p97) target = $region21
  $region20: #{gpt_forward.15} parent=0 // pred_region
    %v100 = vld [vmem:[#allocation2] sm:$0xff]
    %v101 = vld [vmem:[#allocation2 + $0x8] sm:$0xff]
    %v102 = vld [vmem:[%s2] sm:$0x1]
    %v104 = vlaneseq
    %v105 = vshrl.u32 %v104, 7
    %v106 = vsub.s32 0, %v105
    %v107 = vrot.slane %v102, %v106
    %v109 = vadd.f32 %v100, %v107
    %v110 = vadd.f32 %v101, %v107
    %v111 = vpack.c.bf16 %v110, %v109
    %v113 = vunpack.c.l.b16 %v111
    %v114 = vunpack.c.h.b16 %v111
    %v115 = vpack.c.b16 %v113, %v113
    %v116 = vpack.c.b16 %v114, %v114
    %vm119 = vcmask 781312
    %120 = vst.msk [vmem:[%s3] sm:$0xf] %vm119, %v115
    %121 = vst.msk [vmem:[%s3 + $0x4] sm:$0xf] %vm119, %v116
  $region21: #{gpt_forward.15} parent=0 // pred_fallthru
    _
  // Predicated region
  $region22: #{gpt_forward.15} parent=0 // pred_check
    _
  $region23: #{gpt_forward.15} parent=0 // pred_check_branch
    %123 = sbr.rel (0) target = $region25
  $region24: #{gpt_forward.15} parent=0 // pred_region
    _
  $region25: #{gpt_forward.15} parent=0 // pred_fallthru
    _
  // Predicated region
  $region26: #{gpt_forward.15} parent=0 // pred_check
    _
  $region27: #{gpt_forward.15} parent=0 // pred_check_branch
    %125 = sbr.rel (0) target = $region29
  $region28: #{gpt_forward.15} parent=0 // pred_region
    _
  $region29: #{gpt_forward.15} parent=0 // pred_fallthru
    _

// kernel: gpt_forward.16
$region0: #{gpt_forward.16}
  #allocation0 [shape = 'u32[]', space=smem, size = 0x4, offset = 0x4, fixed_abs, tag = 'smem constant byte address 0x4 - core index']
  #allocation1 [shape = 'u32[144,128]{1,0:T(1,128)}', space=vmem, size = 0x12000, scoped, tag = 'internal scratch']
  %s0 = inlined_call_operand.vmem [shape: bf16[8,8,8], index: 0, kind: input, shape index: {}]
  %s1 = inlined_call_operand.vmem [shape: bf16[8,8,8], index: 1, kind: input, shape index: {}]
  %s2 = inlined_call_operand.vmem [shape: bf16[8,8,8], index: 2, kind: input, shape index: {}]
  %s3 = inlined_call_operand.vmem [shape: f32[1,8,8], index: 3, kind: input, shape index: {}]
  %s4 = inlined_call_operand.vmem [shape: bf16[8,8,8], index: 4, kind: output, shape index: {}]
  %s5 = sld [smem:[#allocation0]]
  $region49: #{gpt_forward.16} parent=0
    _
  %s7 = ssub.s32 1, %s5
  %s8 = scalar_select 0, %s7, %s5
  loop: start=0, step=1, limit=4
  $region2: #{gpt_forward.16} parent=0 // loop_pre_header
    _
  $region3: #{gpt_forward.16} parent=0 // loop_header
    %s10 = sphi 0, %s14
    %p11 = scmp.ge.s32.totalorder %s10, 4
    %s20 = sphi 0, %s22
    %s23 = sphi 0, %s20
    %s24 = sphi 0, %s23
    %s40 = sphi 0, %s24
    %s46 = sphi 0, %s48
    %s49 = sphi 0, %s46
    %s50 = sphi 0, %s49
    %s66 = sphi 0, %s50
    %s72 = sphi 0, %s74
    %s75 = sphi 0, %s72
    %s76 = sphi 0, %s75
    %s92 = sphi 0, %s76
    %s96 = sphi 0, %s96
    %s98 = sphi 0, %s96
    %s99 = sphi 0, %s98
    %s113 = sphi 0, %s99
    %s119 = sphi 0, %s121
    %s122 = sphi 0, %s119
    %s123 = sphi 0, %s122
    %s139 = sphi 0, %s123
  $region4: #{gpt_forward.16} parent=0 // loop_header_branch
    %13 = sbr.rel (%p11) target = $region8
  $region5: #{gpt_forward.16} parent=0 // loop_body
    %s15 = ssub.s32 %s10, 1
    %s16 = ssub.s32 %s10, 2
    %s17 = sadd.s32 %s10, 1
    %s18 = ssub.s32 %s10, %s17
    %p19 = scmp.eq.s32.totalorder %s18, 0
    %s21 = sadd.s32 %s20, 1
    %s22 = scalar_select %p19, %s20, %s21
    %p25 = pneg %p19
    %p26 = scmp.eq.s32.totalorder %s10, 1
    %p27 = por %p25, %p26
    %p28 = scmp.ne.s32.totalorder %s20, %s23
    %p29 = scmp.eq.s32.totalorder %s10, 0
    %p30 = por %p28, %p29
    %p31 = scmp.ne.s32.totalorder %s20, %s23
    %p32 = scmp.eq.s32.totalorder %s15, 1
    %p33 = por %p31, %p32
    %p34 = scmp.ne.s32.totalorder %s23, %s24
    %p35 = scmp.eq.s32.totalorder %s15, 0
    %p36 = por %p34, %p35
    %p37 = scmp.ne.s32.totalorder %s23, %s24
    %p38 = scmp.eq.s32.totalorder %s16, 1
    %p39 = por %p37, %p38
    %p41 = scmp.ne.s32.totalorder %s24, %s40
    %p42 = scmp.eq.s32.totalorder %s16, 0
    %p43 = por %p41, %p42
    %s44 = ssub.s32 %s10, %s17
    %p45 = scmp.eq.s32.totalorder %s44, 0
    %s47 = sadd.s32 %s46, 1
    %s48 = scalar_select %p45, %s46, %s47
    %p51 = pneg %p45
    %p52 = scmp.eq.s32.totalorder %s10, 1
    %p53 = por %p51, %p52
    %p54 = scmp.ne.s32.totalorder %s46, %s49
    %p55 = scmp.eq.s32.totalorder %s10, 0
    %p56 = por %p54, %p55
    %p57 = scmp.ne.s32.totalorder %s46, %s49
    %p58 = scmp.eq.s32.totalorder %s15, 1
    %p59 = por %p57, %p58
    %p60 = scmp.ne.s32.totalorder %s49, %s50
    %p61 = scmp.eq.s32.totalorder %s15, 0
    %p62 = por %p60, %p61
    %p63 = scmp.ne.s32.totalorder %s49, %s50
    %p64 = scmp.eq.s32.totalorder %s16, 1
    %p65 = por %p63, %p64
    %p67 = scmp.ne.s32.totalorder %s50, %s66
    %p68 = scmp.eq.s32.totalorder %s16, 0
    %p69 = por %p67, %p68
    %s70 = ssub.s32 %s10, %s17
    %p71 = scmp.eq.s32.totalorder %s70, 0
    %s73 = sadd.s32 %s72, 1
    %s74 = scalar_select %p71, %s72, %s73
    %p77 = pneg %p71
    %p78 = scmp.eq.s32.totalorder %s10, 1
    %p79 = por %p77, %p78
    %p80 = scmp.ne.s32.totalorder %s72, %s75
    %p81 = scmp.eq.s32.totalorder %s10, 0
    %p82 = por %p80, %p81
    %p83 = scmp.ne.s32.totalorder %s72, %s75
    %p84 = scmp.eq.s32.totalorder %s15, 1
    %p85 = por %p83, %p84
    %p86 = scmp.ne.s32.totalorder %s75, %s76
    %p87 = scmp.eq.s32.totalorder %s15, 0
    %p88 = por %p86, %p87
    %p89 = scmp.ne.s32.totalorder %s75, %s76
    %p90 = scmp.eq.s32.totalorder %s16, 1
    %p91 = por %p89, %p90
    %p93 = scmp.ne.s32.totalorder %s76, %s92
    %p94 = scmp.eq.s32.totalorder %s16, 0
    %p95 = por %p93, %p94
    %s97 = sadd.s32 %s96, 1
    %p100 = scmp.eq.s32.totalorder %s10, 1
    %p101 = scmp.ne.s32.totalorder %s96, %s98
    %p102 = scmp.eq.s32.totalorder %s10, 0
    %p103 = por %p101, %p102
    %p104 = scmp.ne.s32.totalorder %s96, %s98
    %p105 = scmp.eq.s32.totalorder %s15, 1
    %p106 = por %p104, %p105
    %p107 = scmp.ne.s32.totalorder %s98, %s99
    %p108 = scmp.eq.s32.totalorder %s15, 0
    %p109 = por %p107, %p108
    %p110 = scmp.ne.s32.totalorder %s98, %s99
    %p111 = scmp.eq.s32.totalorder %s16, 1
    %p112 = por %p110, %p111
    %p114 = scmp.ne.s32.totalorder %s99, %s113
    %p115 = scmp.eq.s32.totalorder %s16, 0
    %p116 = por %p114, %p115
    %s117 = ssub.s32 %s10, %s17
    %p118 = scmp.eq.s32.totalorder %s117, 0
    %s120 = sadd.s32 %s119, 1
    %s121 = scalar_select %p118, %s119, %s120
    %p124 = pneg %p118
    %p125 = scmp.eq.s32.totalorder %s10, 1
    %p126 = por %p124, %p125
    %p127 = scmp.ne.s32.totalorder %s119, %s122
    %p128 = scmp.eq.s32.totalorder %s10, 0
    %p129 = por %p127, %p128
    %p130 = scmp.ne.s32.totalorder %s119, %s122
    %p131 = scmp.eq.s32.totalorder %s15, 1
    %p132 = por %p130, %p131
    %p133 = scmp.ne.s32.totalorder %s122, %s123
    %p134 = scmp.eq.s32.totalorder %s15, 0
    %p135 = por %p133, %p134
    %p136 = scmp.ne.s32.totalorder %s122, %s123
    %p137 = scmp.eq.s32.totalorder %s16, 1
    %p138 = por %p136, %p137
    %p140 = scmp.ne.s32.totalorder %s123, %s139
    %p141 = scmp.eq.s32.totalorder %s16, 0
    %p142 = por %p140, %p141
    %p143 = scmp.le.s32.totalorder 1, %s10
    %p144 = scmp.lt.s32.totalorder %s10, 3
    %p145 = pnand %p143, %p144
    %p146 = pneg %p145
    // Predicated region
    $region9: #{gpt_forward.16} parent=5 // pred_check
      _
    $region10: #{gpt_forward.16} parent=5 // pred_check_branch
      %148 = sbr.rel (%p145) target = $region12
    $region11: #{gpt_forward.16} parent=5 // pred_region
      %s149 = ssub.s32 %s10, 1
      // Predicated region
      $region13: #{gpt_forward.16} parent=11 // pred_check
        %p150 = pneg %p109
      $region14: #{gpt_forward.16} parent=11 // pred_check_branch
        %152 = sbr.rel (%p150) target = $region16
      $region15: #{gpt_forward.16} parent=11 // pred_region
        _
      $region16: #{gpt_forward.16} parent=11 // pred_fallthru
        _
    $region12: #{gpt_forward.16} parent=5 // pred_fallthru
      _
    %p153 = scmp.lt.s32.totalorder %s10, 2
    // Predicated region
    $region17: #{gpt_forward.16} parent=5 // pred_check
      %p154 = pneg %p153
    $region18: #{gpt_forward.16} parent=5 // pred_check_branch
      %156 = sbr.rel (%p154) target = $region20
    $region19: #{gpt_forward.16} parent=5 // pred_region
      // Predicated region
      $region21: #{gpt_forward.16} parent=19 // pred_check
        %p157 = pneg %p30
      $region22: #{gpt_forward.16} parent=19 // pred_check_branch
        %159 = sbr.rel (%p157) target = $region24
      $region23: #{gpt_forward.16} parent=19 // pred_region
        %s160 = smul.u32 4, %s10
        %p161 = scmp.lt.s32.totalorder %s160, 7
        %s162 = scalar_select %p161, %s160, 7
        %s163 = smul.addr %s162, 4
        %s164 = scalar_lea.vmem %s0, %s163
        %s165 = smul.u32 4, %s10
      $region24: #{gpt_forward.16} parent=19 // pred_fallthru
        _
      // Predicated region
      $region25: #{gpt_forward.16} parent=19 // pred_check
        %p166 = pneg %p56
      $region26: #{gpt_forward.16} parent=19 // pred_check_branch
        %168 = sbr.rel (%p166) target = $region28
      $region27: #{gpt_forward.16} parent=19 // pred_region
        %s169 = smul.u32 4, %s10
        %p170 = scmp.lt.s32.totalorder %s169, 7
        %s171 = scalar_select %p170, %s169, 7
        %s172 = smul.addr %s171, 4
        %s173 = scalar_lea.vmem %s1, %s172
        %s174 = smul.u32 4, %s10
      $region28: #{gpt_forward.16} parent=19 // pred_fallthru
        _
      // Predicated region
      $region29: #{gpt_forward.16} parent=19 // pred_check
        %p175 = pneg %p82
      $region30: #{gpt_forward.16} parent=19 // pred_check_branch
        %177 = sbr.rel (%p175) target = $region32
      $region31: #{gpt_forward.16} parent=19 // pred_region
        %s178 = smul.u32 4, %s10
        %p179 = scmp.lt.s32.totalorder %s178, 7
        %s180 = scalar_select %p179, %s178, 7
        %s181 = smul.addr %s180, 4
        %s182 = scalar_lea.vmem %s2, %s181
        %s183 = smul.u32 4, %s10
      $region32: #{gpt_forward.16} parent=19 // pred_fallthru
        _
    $region20: #{gpt_forward.16} parent=5 // pred_fallthru
      _
    %p184 = scmp.le.s32.totalorder 1, %s10
    %p185 = scmp.lt.s32.totalorder %s10, 3
    %p186 = pnand %p184, %p185
    %p187 = pneg %p186
    // Predicated region
    $region33: #{gpt_forward.16} parent=5 // pred_check
      _
    $region34: #{gpt_forward.16} parent=5 // pred_check_branch
      %189 = sbr.rel (%p186) target = $region36
    $region35: #{gpt_forward.16} parent=5 // pred_region
      %s190 = ssub.s32 %s10, 1
      %s191 = smul.u32 4, %s15
      %p192 = scmp.lt.s32.totalorder %s191, 7
      %s193 = scalar_select %p192, %s191, 7
      %s194 = smul.addr %s193, 4
      %s195 = scalar_lea.vmem %s0, %s194
      %p196 = pneg %p36
      %p197 = pneg %p33
      %s198 = smul.u32 4, %s15
      %p199 = scmp.lt.s32.totalorder %s198, 7
      %s200 = scalar_select %p199, %s198, 7
      %s201 = smul.addr %s200, 4
      %s202 = scalar_lea.vmem %s1, %s201
      %p203 = pneg %p62
      %p204 = pneg %p59
      %s205 = smul.u32 4, %s15
      %p206 = scmp.lt.s32.totalorder %s205, 7
      %s207 = scalar_select %p206, %s205, 7
      %s208 = smul.addr %s207, 4
      %s209 = scalar_lea.vmem %s2, %s208
      %p210 = pneg %p88
      %p211 = pneg %p85
      %p212 = pneg %p109
      %p213 = pneg %p106
      %p214 = pneg %p135
      %p215 = pneg %p132
      %s216 = smul.u32 4, %s15
      %p217 = scmp.lt.s32.totalorder %s216, 7
      %s218 = scalar_select %p217, %s216, 7
      %s219 = smul.addr %s218, 4
      %s220 = scalar_lea.vmem %s4, %s219
      %s221 = smul.u32 4, %s15
      %p222 = scmp.lt.s32.totalorder %s221, 7
      %s223 = scalar_select %p222, %s221, 7
      %s224 = smul.addr %s223, 4
      %s225 = scalar_lea.vmem %s0, %s224
      %s226 = smul.u32 4, %s15
      %s227 = smul.u32 4, %s15
      %p228 = scmp.lt.s32.totalorder %s227, 7
      %s229 = scalar_select %p228, %s227, 7
      %s230 = smul.addr %s229, 4
      %s231 = scalar_lea.vmem %s1, %s230
      %s232 = smul.u32 4, %s15
      %s233 = smul.u32 4, %s15
      %p234 = scmp.lt.s32.totalorder %s233, 7
      %s235 = scalar_select %p234, %s233, 7
      %s236 = smul.addr %s235, 4
      %s237 = scalar_lea.vmem %s2, %s236
      %s238 = smul.u32 4, %s15
      %s239 = smul.u32 4, %s15
      %p240 = scmp.lt.s32.totalorder %s239, 7
      %s241 = scalar_select %p240, %s239, 7
      %s242 = smul.addr %s241, 4
      %s243 = scalar_lea.vmem %s4, %s242
      %s244 = smul.u32 4, %s15
      %v246 = vld [vmem:[%s225] sm:$0xf]
      %v247 = vld [vmem:[%s225 + $0x4] sm:$0xf]
      %v248 = vld [vmem:[%s225 + $0x8] sm:$0xf]
      %v249 = vld [vmem:[%s225 + $0xc] sm:$0xf]
      %v250 = vld [vmem:[%s231] sm:$0xf]
      %v251 = vld [vmem:[%s231 + $0x4] sm:$0xf]
      %v252 = vld [vmem:[%s231 + $0x8] sm:$0xf]
      %v253 = vld [vmem:[%s231 + $0xc] sm:$0xf]
      %v254 = vld [vmem:[%s237] sm:$0xf]
      %v255 = vld [vmem:[%s237 + $0x4] sm:$0xf]
      %v256 = vld [vmem:[%s237 + $0x8] sm:$0xf]
      %v257 = vld [vmem:[%s237 + $0xc] sm:$0xf]
      %vm258 = vcmask 64512
      %v260 = vsel %vm258, %v246, 0
      %v263 = vsel %vm258, %v250, 0
      %265 = vmatprep.subr.bf16.mxu0 0
      %266 = vmatpush1.bf16.xpose.msra.mxu0 %v263
      %267 = vmatprep.subr.bf16.mxu0 0
      %268 = vmatpush1.bf16.xpose.msra.mxu0 0
      %269 = vmatprep.subr.bf16.mxu0 0
      %270 = vmatpush1.bf16.xpose.msra.mxu0 0
      %271 = vmatprep.subr.bf16.mxu0 0
      %272 = vmatpush1.bf16.xpose.msra.mxu0 0
      %273 = vmatprep.subr.bf16.mxu0 0
      %274 = vmatpush1.bf16.xpose.msra.mxu0 0
      %275 = vmatprep.subr.bf16.mxu0 0
      %276 = vmatpush1.bf16.xpose.msra.mxu0 0
      %277 = vmatprep.subr.bf16.mxu0 0
      %278 = vmatpush1.bf16.xpose.msra.mxu0 0
      %279 = vmatprep.subr.bf16.mxu0 0
      %280 = vmatpush1.bf16.xpose.msra.mxu0 0
      %281 = vmatprep.subr.bf16.mxu0 0
      %282 = vmatpush1.bf16.xpose.msra.mxu0 0
      %283 = vmatprep.subr.bf16.mxu0 0
      %284 = vmatpush1.bf16.xpose.msra.mxu0 0
      %285 = vmatprep.subr.bf16.mxu0 0
      %286 = vmatpush1.bf16.xpose.msra.mxu0 0
      %287 = vmatprep.subr.bf16.mxu0 0
      %288 = vmatpush1.bf16.xpose.msra.mxu0 0
      %289 = vmatprep.subr.bf16.mxu0 0
      %290 = vmatpush1.bf16.xpose.msra.mxu0 0
      %291 = vmatprep.subr.bf16.mxu0 0
      %292 = vmatpush1.bf16.xpose.msra.mxu0 0
      %293 = vmatprep.subr.bf16.mxu0 0
      %294 = vmatpush1.bf16.xpose.msra.mxu0 0
      %295 = vmatprep.subr.bf16.mxu0 0
      %296 = vmatpush1.bf16.xpose.msra.mxu0 0
      %297 = vmatprep.mubr.bf16.mxu0 0
      %298 = vmatmul.mubr.bf16.gmra.mrb[0].mxu0 %v260
      %v299 = vpop.f32.mrb[0].mxu0
      %v300 = vadd.f32 0.0, %v299
      %v301 = vpop.f32.mrb[0].mxu0
      %v302 = vpop.f32.mrb[0].mxu0
      %v303 = vpop.f32.mrb[0].mxu0
      %304 = vdwg.mxu0
      %v306 = vsel %vm258, %v247, 0
      %v309 = vsel %vm258, %v251, 0
      %311 = vmatprep.subr.bf16.mxu0 0
      %312 = vmatpush1.bf16.xpose.msra.mxu0 %v309
      %313 = vmatprep.subr.bf16.mxu0 0
      %314 = vmatpush1.bf16.xpose.msra.mxu0 0
      %315 = vmatprep.subr.bf16.mxu0 0
      %316 = vmatpush1.bf16.xpose.msra.mxu0 0
      %317 = vmatprep.subr.bf16.mxu0 0
      %318 = vmatpush1.bf16.xpose.msra.mxu0 0
      %319 = vmatprep.subr.bf16.mxu0 0
      %320 = vmatpush1.bf16.xpose.msra.mxu0 0
      %321 = vmatprep.subr.bf16.mxu0 0
      %322 = vmatpush1.bf16.xpose.msra.mxu0 0
      %323 = vmatprep.subr.bf16.mxu0 0
      %324 = vmatpush1.bf16.xpose.msra.mxu0 0
      %325 = vmatprep.subr.bf16.mxu0 0
      %326 = vmatpush1.bf16.xpose.msra.mxu0 0
      %327 = vmatprep.subr.bf16.mxu0 0
      %328 = vmatpush1.bf16.xpose.msra.mxu0 0
      %329 = vmatprep.subr.bf16.mxu0 0
      %330 = vmatpush1.bf16.xpose.msra.mxu0 0
      %331 = vmatprep.subr.bf16.mxu0 0
      %332 = vmatpush1.bf16.xpose.msra.mxu0 0
      %333 = vmatprep.subr.bf16.mxu0 0
      %334 = vmatpush1.bf16.xpose.msra.mxu0 0
      %335 = vmatprep.subr.bf16.mxu0 0
      %336 = vmatpush1.bf16.xpose.msra.mxu0 0
      %337 = vmatprep.subr.bf16.mxu0 0
      %338 = vmatpush1.bf16.xpose.msra.mxu0 0
      %339 = vmatprep.subr.bf16.mxu0 0
      %340 = vmatpush1.bf16.xpose.msra.mxu0 0
      %341 = vmatprep.subr.bf16.mxu0 0
      %342 = vmatpush1.bf16.xpose.msra.mxu0 0
      %343 = vmatprep.mubr.bf16.mxu0 0
      %344 = vmatmul.mubr.bf16.gmra.mrb[0].mxu0 %v306
      %v345 = vpop.f32.mrb[0].mxu0
      %v346 = vadd.f32 0.0, %v345
      %v347 = vpop.f32.mrb[0].mxu0
      %v348 = vpop.f32.mrb[0].mxu0
      %v349 = vpop.f32.mrb[0].mxu0
      %350 = vdwg.mxu0
      %v352 = vsel %vm258, %v248, 0
      %v355 = vsel %vm258, %v252, 0
      %357 = vmatprep.subr.bf16.mxu0 0
      %358 = vmatpush1.bf16.xpose.msra.mxu0 %v355
      %359 = vmatprep.subr.bf16.mxu0 0
      %360 = vmatpush1.bf16.xpose.msra.mxu0 0
      %361 = vmatprep.subr.bf16.mxu0 0
      %362 = vmatpush1.bf16.xpose.msra.mxu0 0
      %363 = vmatprep.subr.bf16.mxu0 0
      %364 = vmatpush1.bf16.xpose.msra.mxu0 0
      %365 = vmatprep.subr.bf16.mxu0 0
      %366 = vmatpush1.bf16.xpose.msra.mxu0 0
      %367 = vmatprep.subr.bf16.mxu0 0
      %368 = vmatpush1.bf16.xpose.msra.mxu0 0
      %369 = vmatprep.subr.bf16.mxu0 0
      %370 = vmatpush1.bf16.xpose.msra.mxu0 0
      %371 = vmatprep.subr.bf16.mxu0 0
      %372 = vmatpush1.bf16.xpose.msra.mxu0 0
      %373 = vmatprep.subr.bf16.mxu0 0
      %374 = vmatpush1.bf16.xpose.msra.mxu0 0
      %375 = vmatprep.subr.bf16.mxu0 0
      %376 = vmatpush1.bf16.xpose.msra.mxu0 0
      %377 = vmatprep.subr.bf16.mxu0 0
      %378 = vmatpush1.bf16.xpose.msra.mxu0 0
      %379 = vmatprep.subr.bf16.mxu0 0
      %380 = vmatpush1.bf16.xpose.msra.mxu0 0
      %381 = vmatprep.subr.bf16.mxu0 0
      %382 = vmatpush1.bf16.xpose.msra.mxu0 0
      %383 = vmatprep.subr.bf16.mxu0 0
      %384 = vmatpush1.bf16.xpose.msra.mxu0 0
      %385 = vmatprep.subr.bf16.mxu0 0
      %386 = vmatpush1.bf16.xpose.msra.mxu0 0
      %387 = vmatprep.subr.bf16.mxu0 0
      %388 = vmatpush1.bf16.xpose.msra.mxu0 0
      %389 = vmatprep.mubr.bf16.mxu0 0
      %390 = vmatmul.mubr.bf16.gmra.mrb[0].mxu0 %v352
      %v391 = vpop.f32.mrb[0].mxu0
      %v392 = vadd.f32 0.0, %v391
      %v393 = vpop.f32.mrb[0].mxu0
      %v394 = vpop.f32.mrb[0].mxu0
      %v395 = vpop.f32.mrb[0].mxu0
      %396 = vdwg.mxu0
      %v398 = vsel %vm258, %v249, 0
      %v401 = vsel %vm258, %v253, 0
      %403 = vmatprep.subr.bf16.mxu0 0
      %404 = vmatpush1.bf16.xpose.msra.mxu0 %v401
      %405 = vmatprep.subr.bf16.mxu0 0
      %406 = vmatpush1.bf16.xpose.msra.mxu0 0
      %407 = vmatprep.subr.bf16.mxu0 0
      %408 = vmatpush1.bf16.xpose.msra.mxu0 0
      %409 = vmatprep.subr.bf16.mxu0 0
      %410 = vmatpush1.bf16.xpose.msra.mxu0 0
      %411 = vmatprep.subr.bf16.mxu0 0
      %412 = vmatpush1.bf16.xpose.msra.mxu0 0
      %413 = vmatprep.subr.bf16.mxu0 0
      %414 = vmatpush1.bf16.xpose.msra.mxu0 0
      %415 = vmatprep.subr.bf16.mxu0 0
      %416 = vmatpush1.bf16.xpose.msra.mxu0 0
      %417 = vmatprep.subr.bf16.mxu0 0
      %418 = vmatpush1.bf16.xpose.msra.mxu0 0
      %419 = vmatprep.subr.bf16.mxu0 0
      %420 = vmatpush1.bf16.xpose.msra.mxu0 0
      %421 = vmatprep.subr.bf16.mxu0 0
      %422 = vmatpush1.bf16.xpose.msra.mxu0 0
      %423 = vmatprep.subr.bf16.mxu0 0
      %424 = vmatpush1.bf16.xpose.msra.mxu0 0
      %425 = vmatprep.subr.bf16.mxu0 0
      %426 = vmatpush1.bf16.xpose.msra.mxu0 0
      %427 = vmatprep.subr.bf16.mxu0 0
      %428 = vmatpush1.bf16.xpose.msra.mxu0 0
      %429 = vmatprep.subr.bf16.mxu0 0
      %430 = vmatpush1.bf16.xpose.msra.mxu0 0
      %431 = vmatprep.subr.bf16.mxu0 0
      %432 = vmatpush1.bf16.xpose.msra.mxu0 0
      %433 = vmatprep.subr.bf16.mxu0 0
      %434 = vmatpush1.bf16.xpose.msra.mxu0 0
      %435 = vmatprep.mubr.bf16.mxu0 0
      %436 = vmatmul.mubr.bf16.gmra.mrb[0].mxu0 %v398
      %v437 = vpop.f32.mrb[0].mxu0
      %v438 = vadd.f32 0.0, %v437
      %v439 = vpop.f32.mrb[0].mxu0
      %v440 = vpop.f32.mrb[0].mxu0
      %v441 = vpop.f32.mrb[0].mxu0
      %442 = vdwg.mxu0
      %v443 = vmul.f32 %v300, 0.35355338
      %v444 = vmul.f32 %v346, 0.35355338
      %v445 = vmul.f32 %v392, 0.35355338
      %v446 = vmul.f32 %v438, 0.35355338
      %v447 = vld [vmem:[%s3] sm:$0xff]
      %vm448 = vcmp.eq.f32.partialorder %v447, 0.0
      %v449 = vsel %vm448, 1, 0
      %vm450 = vcmp.eq.s32.totalorder %v449, 1
      %v451 = vsel %vm450, -1e+09, %v443
      %v452 = vsel %vm450, -1e+09, %v444
      %v453 = vsel %vm450, -1e+09, %v445
      %v454 = vsel %vm450, -1e+09, %v446
      %v455 = vsel %vm258, %v451, -inf
      %456 = vmax.xlane.f32.xlu0 %v455
      %v457 = vpop.xlane.xlu0 %456
      %v458 = vsel %vm258, %v452, -inf
      %459 = vmax.xlane.f32.xlu0 %v458
      %v460 = vpop.xlane.xlu0 %459
      %v461 = vsel %vm258, %v453, -inf
      %462 = vmax.xlane.f32.xlu0 %v461
      %v463 = vpop.xlane.xlu0 %462
      %v464 = vsel %vm258, %v454, -inf
      %465 = vmax.xlane.f32.xlu0 %v464
      %v466 = vpop.xlane.xlu0 %465
      %v467 = vsub.f32 %v451, %v457
      %v468 = vsub.f32 %v452, %v460
      %v469 = vsub.f32 %v453, %v463
      %v470 = vsub.f32 %v454, %v466
      %v471 = vmul.f32 %v467, 1.442695
      %v472 = vpow.pop %v471
      %v473 = vmul.f32 %v468, 1.442695
      %v474 = vpow.pop %v473
      %v475 = vmul.f32 %v469, 1.442695
      %v476 = vpow.pop %v475
      %v477 = vmul.f32 %v470, 1.442695
      %v478 = vpow.pop %v477
      %v479 = vsel %vm258, %v472, 0.0
      %480 = vadd.xlane.f32.xlu0 %v479
      %v481 = vpop.xlane.xlu0 %480
      %v482 = vsel %vm258, %v474, 0.0
      %483 = vadd.xlane.f32.xlu0 %v482
      %v484 = vpop.xlane.xlu0 %483
      %v485 = vsel %vm258, %v476, 0.0
      %486 = vadd.xlane.f32.xlu0 %v485
      %v487 = vpop.xlane.xlu0 %486
      %v488 = vsel %vm258, %v478, 0.0
      %489 = vadd.xlane.f32.xlu0 %v488
      %v490 = vpop.xlane.xlu0 %489
      %v491 = vrcp.pop %v481
      %v492 = vrcp.pop %v484
      %v493 = vrcp.pop %v487
      %v494 = vrcp.pop %v490
      %v495 = vmul.f32 %v472, %v491
      %v496 = vmul.f32 %v474, %v492
      %v497 = vmul.f32 %v476, %v493
      %v498 = vmul.f32 %v478, %v494
      %v499 = vpack.c.bf16 %v495, %v495
      %v500 = vpack.c.bf16 %v496, %v496
      %v501 = vpack.c.bf16 %v497, %v497
      %v502 = vpack.c.bf16 %v498, %v498
      %v504 = vsel %vm258, %v499, 0
      %vm506 = vcmask 1043456
      %v508 = vsel %vm506, %v254, 0
      %510 = vmatprep.subr.bf16.mxu0 0
      %511 = vmatpush1.bf16.msra.mxu0 %v508
      %512 = vmatprep.subr.bf16.mxu0 0
      %513 = vmatpush1.bf16.msra.mxu0 0
      %514 = vmatprep.subr.bf16.mxu0 0
      %515 = vmatpush1.bf16.msra.mxu0 0
      %516 = vmatprep.subr.bf16.mxu0 0
      %517 = vmatpush1.bf16.msra.mxu0 0
      %518 = vmatprep.subr.bf16.mxu0 0
      %519 = vmatpush1.bf16.msra.mxu0 0
      %520 = vmatprep.subr.bf16.mxu0 0
      %521 = vmatpush1.bf16.msra.mxu0 0
      %522 = vmatprep.subr.bf16.mxu0 0
      %523 = vmatpush1.bf16.msra.mxu0 0
      %524 = vmatprep.subr.bf16.mxu0 0
      %525 = vmatpush1.bf16.msra.mxu0 0
      %526 = vmatprep.subr.bf16.mxu0 0
      %527 = vmatpush1.bf16.msra.mxu0 0
      %528 = vmatprep.subr.bf16.mxu0 0
      %529 = vmatpush1.bf16.msra.mxu0 0
      %530 = vmatprep.subr.bf16.mxu0 0
      %531 = vmatpush1.bf16.msra.mxu0 0
      %532 = vmatprep.subr.bf16.mxu0 0
      %533 = vmatpush1.bf16.msra.mxu0 0
      %534 = vmatprep.subr.bf16.mxu0 0
      %535 = vmatpush1.bf16.msra.mxu0 0
      %536 = vmatprep.subr.bf16.mxu0 0
      %537 = vmatpush1.bf16.msra.mxu0 0
      %538 = vmatprep.subr.bf16.mxu0 0
      %539 = vmatpush1.bf16.msra.mxu0 0
      %540 = vmatprep.subr.bf16.mxu0 0
      %541 = vmatpush1.bf16.msra.mxu0 0
      %542 = vmatprep.mubr.bf16.mxu0 0
      %543 = vmatmul.mubr.bf16.gmra.mrb[0].mxu0 %v504
      %v544 = vpop.f32.mrb[0].mxu0
      %v545 = vadd.f32 0.0, %v544
      %v546 = vpop.f32.mrb[0].mxu0
      %v547 = vpop.f32.mrb[0].mxu0
      %v548 = vpop.f32.mrb[0].mxu0
      %549 = vdwg.mxu0
      %v551 = vsel %vm258, %v500, 0
      %v554 = vsel %vm506, %v255, 0
      %556 = vmatprep.subr.bf16.mxu0 0
      %557 = vmatpush1.bf16.msra.mxu0 %v554
      %558 = vmatprep.subr.bf16.mxu0 0
      %559 = vmatpush1.bf16.msra.mxu0 0
      %560 = vmatprep.subr.bf16.mxu0 0
      %561 = vmatpush1.bf16.msra.mxu0 0
      %562 = vmatprep.subr.bf16.mxu0 0
      %563 = vmatpush1.bf16.msra.mxu0 0
      %564 = vmatprep.subr.bf16.mxu0 0
      %565 = vmatpush1.bf16.msra.mxu0 0
      %566 = vmatprep.subr.bf16.mxu0 0
      %567 = vmatpush1.bf16.msra.mxu0 0
      %568 = vmatprep.subr.bf16.mxu0 0
      %569 = vmatpush1.bf16.msra.mxu0 0
      %570 = vmatprep.subr.bf16.mxu0 0
      %571 = vmatpush1.bf16.msra.mxu0 0
      %572 = vmatprep.subr.bf16.mxu0 0
      %573 = vmatpush1.bf16.msra.mxu0 0
      %574 = vmatprep.subr.bf16.mxu0 0
      %575 = vmatpush1.bf16.msra.mxu0 0
      %576 = vmatprep.subr.bf16.mxu0 0
      %577 = vmatpush1.bf16.msra.mxu0 0
      %578 = vmatprep.subr.bf16.mxu0 0
      %579 = vmatpush1.bf16.msra.mxu0 0
      %580 = vmatprep.subr.bf16.mxu0 0
      %581 = vmatpush1.bf16.msra.mxu0 0
      %582 = vmatprep.subr.bf16.mxu0 0
      %583 = vmatpush1.bf16.msra.mxu0 0
      %584 = vmatprep.subr.bf16.mxu0 0
      %585 = vmatpush1.bf16.msra.mxu0 0
      %586 = vmatprep.subr.bf16.mxu0 0
      %587 = vmatpush1.bf16.msra.mxu0 0
      %588 = vmatprep.mubr.bf16.mxu0 0
      %589 = vmatmul.mubr.bf16.gmra.mrb[0].mxu0 %v551
      %v590 = vpop.f32.mrb[0].mxu0
      %v591 = vadd.f32 0.0, %v590
      %v592 = vpop.f32.mrb[0].mxu0
      %v593 = vpop.f32.mrb[0].mxu0
      %v594 = vpop.f32.mrb[0].mxu0
      %595 = vdwg.mxu0
      %v597 = vsel %vm258, %v501, 0
      %v600 = vsel %vm506, %v256, 0
      %602 = vmatprep.subr.bf16.mxu0 0
      %603 = vmatpush1.bf16.msra.mxu0 %v600
      %604 = vmatprep.subr.bf16.mxu0 0
      %605 = vmatpush1.bf16.msra.mxu0 0
      %606 = vmatprep.subr.bf16.mxu0 0
      %607 = vmatpush1.bf16.msra.mxu0 0
      %608 = vmatprep.subr.bf16.mxu0 0
      %609 = vmatpush1.bf16.msra.mxu0 0
      %610 = vmatprep.subr.bf16.mxu0 0
      %611 = vmatpush1.bf16.msra.mxu0 0
      %612 = vmatprep.subr.bf16.mxu0 0
      %613 = vmatpush1.bf16.msra.mxu0 0
      %614 = vmatprep.subr.bf16.mxu0 0
      %615 = vmatpush1.bf16.msra.mxu0 0
      %616 = vmatprep.subr.bf16.mxu0 0
      %617 = vmatpush1.bf16.msra.mxu0 0
      %618 = vmatprep.subr.bf16.mxu0 0
      %619 = vmatpush1.bf16.msra.mxu0 0
      %620 = vmatprep.subr.bf16.mxu0 0
      %621 = vmatpush1.bf16.msra.mxu0 0
      %622 = vmatprep.subr.bf16.mxu0 0
      %623 = vmatpush1.bf16.msra.mxu0 0
      %624 = vmatprep.subr.bf16.mxu0 0
      %625 = vmatpush1.bf16.msra.mxu0 0
      %626 = vmatprep.subr.bf16.mxu0 0
      %627 = vmatpush1.bf16.msra.mxu0 0
      %628 = vmatprep.subr.bf16.mxu0 0
      %629 = vmatpush1.bf16.msra.mxu0 0
      %630 = vmatprep.subr.bf16.mxu0 0
      %631 = vmatpush1.bf16.msra.mxu0 0
      %632 = vmatprep.subr.bf16.mxu0 0
      %633 = vmatpush1.bf16.msra.mxu0 0
      %634 = vmatprep.mubr.bf16.mxu0 0
      %635 = vmatmul.mubr.bf16.gmra.mrb[0].mxu0 %v597
      %v636 = vpop.f32.mrb[0].mxu0
      %v637 = vadd.f32 0.0, %v636
      %v638 = vpop.f32.mrb[0].mxu0
      %v639 = vpop.f32.mrb[0].mxu0
      %v640 = vpop.f32.mrb[0].mxu0
      %641 = vdwg.mxu0
      %v643 = vsel %vm258, %v502, 0
      %v646 = vsel %vm506, %v257, 0
      %648 = vmatprep.subr.bf16.mxu0 0
      %649 = vmatpush1.bf16.msra.mxu0 %v646
      %650 = vmatprep.subr.bf16.mxu0 0
      %651 = vmatpush1.bf16.msra.mxu0 0
      %652 = vmatprep.subr.bf16.mxu0 0
      %653 = vmatpush1.bf16.msra.mxu0 0
      %654 = vmatprep.subr.bf16.mxu0 0
      %655 = vmatpush1.bf16.msra.mxu0 0
      %656 = vmatprep.subr.bf16.mxu0 0
      %657 = vmatpush1.bf16.msra.mxu0 0
      %658 = vmatprep.subr.bf16.mxu0 0
      %659 = vmatpush1.bf16.msra.mxu0 0
      %660 = vmatprep.subr.bf16.mxu0 0
      %661 = vmatpush1.bf16.msra.mxu0 0
      %662 = vmatprep.subr.bf16.mxu0 0
      %663 = vmatpush1.bf16.msra.mxu0 0
      %664 = vmatprep.subr.bf16.mxu0 0
      %665 = vmatpush1.bf16.msra.mxu0 0
      %666 = vmatprep.subr.bf16.mxu0 0
      %667 = vmatpush1.bf16.msra.mxu0 0
      %668 = vmatprep.subr.bf16.mxu0 0
      %669 = vmatpush1.bf16.msra.mxu0 0
      %670 = vmatprep.subr.bf16.mxu0 0
      %671 = vmatpush1.bf16.msra.mxu0 0
      %672 = vmatprep.subr.bf16.mxu0 0
      %673 = vmatpush1.bf16.msra.mxu0 0
      %674 = vmatprep.subr.bf16.mxu0 0
      %675 = vmatpush1.bf16.msra.mxu0 0
      %676 = vmatprep.subr.bf16.mxu0 0
      %677 = vmatpush1.bf16.msra.mxu0 0
      %678 = vmatprep.subr.bf16.mxu0 0
      %679 = vmatpush1.bf16.msra.mxu0 0
      %680 = vmatprep.mubr.bf16.mxu0 0
      %681 = vmatmul.mubr.bf16.gmra.mrb[0].mxu0 %v643
      %v682 = vpop.f32.mrb[0].mxu0
      %v683 = vadd.f32 0.0, %v682
      %v684 = vpop.f32.mrb[0].mxu0
      %v685 = vpop.f32.mrb[0].mxu0
      %v686 = vpop.f32.mrb[0].mxu0
      %687 = vdwg.mxu0
      %v688 = vpack.c.bf16 %v545, %v545
      %v689 = vpack.c.bf16 %v591, %v591
      %v690 = vpack.c.bf16 %v637, %v637
      %v691 = vpack.c.bf16 %v683, %v683
      %vm692 = vcmask 60416
      %693 = vst.msk [vmem:[%s243] sm:$0xf] %vm692, %v688
      %694 = vst.msk [vmem:[%s243 + $0x4] sm:$0xf] %vm692, %v689
      %695 = vst.msk [vmem:[%s243 + $0x8] sm:$0xf] %vm692, %v690
      %696 = vst.msk [vmem:[%s243 + $0xc] sm:$0xf] %vm692, %v691
      %s697 = smul.u32 4, %s15
      %p698 = scmp.lt.s32.totalorder %s697, 7
      %s699 = scalar_select %p698, %s697, 7
      %s700 = smul.addr %s699, 4
      %s701 = scalar_lea.vmem %s4, %s700
      // Predicated region
      $region37: #{gpt_forward.16} parent=35 // pred_check
        %p702 = pneg %p132
      $region38: #{gpt_forward.16} parent=35 // pred_check_branch
        %704 = sbr.rel (%p702) target = $region40
      $region39: #{gpt_forward.16} parent=35 // pred_region
        %s705 = smul.u32 4, %s15
      $region40: #{gpt_forward.16} parent=35 // pred_fallthru
        _
    $region36: #{gpt_forward.16} parent=5 // pred_fallthru
      _
    %p706 = scmp.le.s32.totalorder 2, %s10
    // Predicated region
    $region41: #{gpt_forward.16} parent=5 // pred_check
      %p707 = pneg %p706
    $region42: #{gpt_forward.16} parent=5 // pred_check_branch
      %709 = sbr.rel (%p707) target = $region44
    $region43: #{gpt_forward.16} parent=5 // pred_region
      %s710 = ssub.s32 %s10, 2
      // Predicated region
      $region45: #{gpt_forward.16} parent=43 // pred_check
        %p711 = pneg %p138
      $region46: #{gpt_forward.16} parent=43 // pred_check_branch
        %713 = sbr.rel (%p711) target = $region48
      $region47: #{gpt_forward.16} parent=43 // pred_region
        %s714 = smul.u32 4, %s16
        %p715 = scmp.lt.s32.totalorder %s714, 7
        %s716 = scalar_select %p715, %s714, 7
        %s717 = smul.addr %s716, 4
        %s718 = scalar_lea.vmem %s4, %s717
      $region48: #{gpt_forward.16} parent=43 // pred_fallthru
        _
    $region44: #{gpt_forward.16} parent=5 // pred_fallthru
      _
  $region6: #{gpt_forward.16} parent=0 // loop_footer
    %s14 = sadd.s32 1, %s10
  $region7: #{gpt_forward.16} parent=0 // loop_footer_branch
    %9 = sbr.rel target = $region3
  $region8: #{gpt_forward.16} parent=0 // loop_exit
    _

// kernel: gpt_forward.21
$region0: #{gpt_forward.21}
  #allocation0 [shape = 'u32[]', space=smem, size = 0x4, offset = 0x4, fixed_abs, tag = 'smem constant byte address 0x4 - core index']
  #allocation1 [shape = 'u32[144,128]{1,0:T(1,128)}', space=vmem, size = 0x12000, scoped, tag = 'internal scratch']
  %s0 = inlined_call_operand.vmem [shape: bf16[16,32], index: 0, kind: input, shape index: {}, may-alias: {0,5}]
  %s1 = inlined_call_operand.vmem [shape: bf16[32,128], index: 1, kind: input, shape index: {}]
  %s2 = inlined_call_operand.vmem [shape: f32[1,128], index: 2, kind: input, shape index: {}]
  %s3 = inlined_call_operand.vmem [shape: bf16[128,32], index: 3, kind: input, shape index: {}]
  %s4 = inlined_call_operand.vmem [shape: f32[1,32], index: 4, kind: input, shape index: {}]
  %s5 = inlined_call_operand.vmem [shape: bf16[16,32], index: 5, kind: input, shape index: {}, may-alias: {0,5}]
  %s6 = inlined_call_operand.vmem [shape: f32[1,32], index: 6, kind: input, shape index: {}]
  %s7 = inlined_call_operand.vmem [shape: f32[1,32], index: 7, kind: input, shape index: {}]
  %s8 = inlined_call_operand.vmem [shape: bf16[16,32], index: 8, kind: output, shape index: {}]
  %s9 = sld [smem:[#allocation0]]
  $region42: #{gpt_forward.21} parent=0
    _
  %s11 = ssub.s32 1, %s9
  %s12 = scalar_select 0, %s11, %s9
  // Predicated region
  $region2: #{gpt_forward.21} parent=0 // pred_check
    _
  $region3: #{gpt_forward.21} parent=0 // pred_check_branch
    %14 = sbr.rel (0) target = $region5
  $region4: #{gpt_forward.21} parent=0 // pred_region
    _
  $region5: #{gpt_forward.21} parent=0 // pred_fallthru
    _
  // Predicated region
  $region6: #{gpt_forward.21} parent=0 // pred_check
    _
  $region7: #{gpt_forward.21} parent=0 // pred_check_branch
    %16 = sbr.rel (0) target = $region9
  $region8: #{gpt_forward.21} parent=0 // pred_region
    _
  $region9: #{gpt_forward.21} parent=0 // pred_fallthru
    _
  // Predicated region
  $region10: #{gpt_forward.21} parent=0 // pred_check
    _
  $region11: #{gpt_forward.21} parent=0 // pred_check_branch
    %18 = sbr.rel (0) target = $region13
  $region12: #{gpt_forward.21} parent=0 // pred_region
    _
  $region13: #{gpt_forward.21} parent=0 // pred_fallthru
    _
  // Predicated region
  $region14: #{gpt_forward.21} parent=0 // pred_check
    _
  $region15: #{gpt_forward.21} parent=0 // pred_check_branch
    %20 = sbr.rel (0) target = $region17
  $region16: #{gpt_forward.21} parent=0 // pred_region
    _
  $region17: #{gpt_forward.21} parent=0 // pred_fallthru
    _
  // Predicated region
  $region18: #{gpt_forward.21} parent=0 // pred_check
    _
  $region19: #{gpt_forward.21} parent=0 // pred_check_branch
    %22 = sbr.rel (0) target = $region21
  $region20: #{gpt_forward.21} parent=0 // pred_region
    _
  $region21: #{gpt_forward.21} parent=0 // pred_fallthru
    _
  // Predicated region
  $region22: #{gpt_forward.21} parent=0 // pred_check
    _
  $region23: #{gpt_forward.21} parent=0 // pred_check_branch
    %24 = sbr.rel (0) target = $region25
  $region24: #{gpt_forward.21} parent=0 // pred_region
    _
  $region25: #{gpt_forward.21} parent=0 // pred_fallthru
    _
  // Predicated region
  $region26: #{gpt_forward.21} parent=0 // pred_check
    _
  $region27: #{gpt_forward.21} parent=0 // pred_check_branch
    %26 = sbr.rel (0) target = $region29
  $region28: #{gpt_forward.21} parent=0 // pred_region
    _
  $region29: #{gpt_forward.21} parent=0 // pred_fallthru
    _
  // Predicated region
  $region30: #{gpt_forward.21} parent=0 // pred_check
    _
  $region31: #{gpt_forward.21} parent=0 // pred_check_branch
    %28 = sbr.rel (0) target = $region33
  $region32: #{gpt_forward.21} parent=0 // pred_region
    _
  $region33: #{gpt_forward.21} parent=0 // pred_fallthru
    _
  %v30 = vld [vmem:[%s0] sm:$0xf]
  %v31 = vld [vmem:[%s0 + $0x4] sm:$0xf]
  %v32 = vld [vmem:[%s1] sm:$0xf]
  %v33 = vld [vmem:[%s1 + $0x4] sm:$0xf]
  %v34 = vld [vmem:[%s1 + $0x8] sm:$0xf]
  %v35 = vld [vmem:[%s1 + $0xc] sm:$0xf]
  %v36 = vld [vmem:[%s2] sm:$0x1]
  %v38 = vlaneseq
  %v39 = vshrl.u32 %v38, 7
  %v40 = vsub.s32 0, %v39
  %v41 = vrot.slane %v36, %v40
  %v45 = vunpack.c.l.b16 %v30
  %v46 = vunpack.c.l.b16 %v31
  %v47 = vpack.c.b16 %v46, %v45
  %v52 = vunpack.c.l.b16 %v32
  %v53 = vunpack.c.l.b16 %v33
  %v54 = vunpack.c.l.b16 %v34
  %v55 = vunpack.c.l.b16 %v35
  %v56 = vpack.c.b16 %v53, %v52
  %v57 = vpack.c.b16 %v55, %v54
  %vm60 = vcmask 261120
  %v62 = vsel %vm60, %v47, 0
  %64 = vmatprep.subr.bf16.mxu0 0
  %65 = vmatpush1.bf16.msra.mxu0 %v56
  %66 = vmatprep.subr.bf16.mxu0 0
  %67 = vmatpush1.bf16.msra.mxu0 %v57
  %68 = vmatprep.subr.bf16.mxu0 0
  %69 = vmatpush1.bf16.msra.mxu0 0
  %70 = vmatprep.subr.bf16.mxu0 0
  %71 = vmatpush1.bf16.msra.mxu0 0
  %72 = vmatprep.subr.bf16.mxu0 0
  %73 = vmatpush1.bf16.msra.mxu0 0
  %74 = vmatprep.subr.bf16.mxu0 0
  %75 = vmatpush1.bf16.msra.mxu0 0
  %76 = vmatprep.subr.bf16.mxu0 0
  %77 = vmatpush1.bf16.msra.mxu0 0
  %78 = vmatprep.subr.bf16.mxu0 0
  %79 = vmatpush1.bf16.msra.mxu0 0
  %80 = vmatprep.subr.bf16.mxu0 0
  %81 = vmatpush1.bf16.msra.mxu0 0
  %82 = vmatprep.subr.bf16.mxu0 0
  %83 = vmatpush1.bf16.msra.mxu0 0
  %84 = vmatprep.subr.bf16.mxu0 0
  %85 = vmatpush1.bf16.msra.mxu0 0
  %86 = vmatprep.subr.bf16.mxu0 0
  %87 = vmatpush1.bf16.msra.mxu0 0
  %88 = vmatprep.subr.bf16.mxu0 0
  %89 = vmatpush1.bf16.msra.mxu0 0
  %90 = vmatprep.subr.bf16.mxu0 0
  %91 = vmatpush1.bf16.msra.mxu0 0
  %92 = vmatprep.subr.bf16.mxu0 0
  %93 = vmatpush1.bf16.msra.mxu0 0
  %94 = vmatprep.subr.bf16.mxu0 0
  %95 = vmatpush1.bf16.msra.mxu0 0
  %96 = vmatprep.mubr.bf16.mxu0 0
  %97 = vmatmul.mubr.bf16.gmra.mrb[0].mxu0 %v62
  %v98 = vpop.f32.mrb[0].mxu0
  %v99 = vadd.f32 %v41, %v98
  %v100 = vpop.f32.mrb[0].mxu0
  %v101 = vpop.f32.mrb[0].mxu0
  %v102 = vadd.f32 %v41, %v101
  %v103 = vpop.f32.mrb[0].mxu0
  %104 = vdwg.mxu0
  %v105 = vmax.f32 %v99, 0.0
  %v106 = vmax.f32 %v102, 0.0
  %v107 = vpack.c.bf16 %v106, %v105
  %v108 = vld [vmem:[%s3] sm:$0xf]
  %v109 = vld [vmem:[%s3 + $0x4] sm:$0xf]
  %v110 = vld [vmem:[%s3 + $0x8] sm:$0xf]
  %v111 = vld [vmem:[%s3 + $0xc] sm:$0xf]
  %v112 = vld [vmem:[%s3 + $0x10] sm:$0xf]
  %v113 = vld [vmem:[%s3 + $0x14] sm:$0xf]
  %v114 = vld [vmem:[%s3 + $0x18] sm:$0xf]
  %v115 = vld [vmem:[%s3 + $0x1c] sm:$0xf]
  %v116 = vld [vmem:[%s3 + $0x20] sm:$0xf]
  %v117 = vld [vmem:[%s3 + $0x24] sm:$0xf]
  %v118 = vld [vmem:[%s3 + $0x28] sm:$0xf]
  %v119 = vld [vmem:[%s3 + $0x2c] sm:$0xf]
  %v120 = vld [vmem:[%s3 + $0x30] sm:$0xf]
  %v121 = vld [vmem:[%s3 + $0x34] sm:$0xf]
  %v122 = vld [vmem:[%s3 + $0x38] sm:$0xf]
  %v123 = vld [vmem:[%s3 + $0x3c] sm:$0xf]
  %v124 = vld [vmem:[%s4] sm:$0x1]
  %v126 = vlaneseq
  %v127 = vshrl.u32 %v126, 7
  %v128 = vsub.s32 0, %v127
  %v129 = vrot.slane %v124, %v128
  %v147 = vunpack.c.l.b16 %v108
  %v148 = vunpack.c.l.b16 %v109
  %v149 = vunpack.c.l.b16 %v110
  %v150 = vunpack.c.l.b16 %v111
  %v151 = vunpack.c.l.b16 %v112
  %v152 = vunpack.c.l.b16 %v113
  %v153 = vunpack.c.l.b16 %v114
  %v154 = vunpack.c.l.b16 %v115
  %v155 = vunpack.c.l.b16 %v116
  %v156 = vunpack.c.l.b16 %v117
  %v157 = vunpack.c.l.b16 %v118
  %v158 = vunpack.c.l.b16 %v119
  %v159 = vunpack.c.l.b16 %v120
  %v160 = vunpack.c.l.b16 %v121
  %v161 = vunpack.c.l.b16 %v122
  %v162 = vunpack.c.l.b16 %v123
  %v163 = vpack.c.b16 %v148, %v147
  %v164 = vpack.c.b16 %v150, %v149
  %v165 = vpack.c.b16 %v152, %v151
  %v166 = vpack.c.b16 %v154, %v153
  %v167 = vpack.c.b16 %v156, %v155
  %v168 = vpack.c.b16 %v158, %v157
  %v169 = vpack.c.b16 %v160, %v159
  %v170 = vpack.c.b16 %v162, %v161
  %179 = vmatprep.subr.bf16.mxu0 0
  %180 = vmatpush1.bf16.msra.mxu0 %v163
  %181 = vmatprep.subr.bf16.mxu0 0
  %182 = vmatpush1.bf16.msra.mxu0 %v164
  %183 = vmatprep.subr.bf16.mxu0 0
  %184 = vmatpush1.bf16.msra.mxu0 %v165
  %185 = vmatprep.subr.bf16.mxu0 0
  %186 = vmatpush1.bf16.msra.mxu0 %v166
  %187 = vmatprep.subr.bf16.mxu0 0
  %188 = vmatpush1.bf16.msra.mxu0 %v167
  %189 = vmatprep.subr.bf16.mxu0 0
  %190 = vmatpush1.bf16.msra.mxu0 %v168
  %191 = vmatprep.subr.bf16.mxu0 0
  %192 = vmatpush1.bf16.msra.mxu0 %v169
  %193 = vmatprep.subr.bf16.mxu0 0
  %194 = vmatpush1.bf16.msra.mxu0 %v170
  %195 = vmatprep.subr.bf16.mxu0 0
  %196 = vmatpush1.bf16.msra.mxu0 0
  %197 = vmatprep.subr.bf16.mxu0 0
  %198 = vmatpush1.bf16.msra.mxu0 0
  %199 = vmatprep.subr.bf16.mxu0 0
  %200 = vmatpush1.bf16.msra.mxu0 0
  %201 = vmatprep.subr.bf16.mxu0 0
  %202 = vmatpush1.bf16.msra.mxu0 0
  %203 = vmatprep.subr.bf16.mxu0 0
  %204 = vmatpush1.bf16.msra.mxu0 0
  %205 = vmatprep.subr.bf16.mxu0 0
  %206 = vmatpush1.bf16.msra.mxu0 0
  %207 = vmatprep.subr.bf16.mxu0 0
  %208 = vmatpush1.bf16.msra.mxu0 0
  %209 = vmatprep.subr.bf16.mxu0 0
  %210 = vmatpush1.bf16.msra.mxu0 0
  %211 = vmatprep.mubr.bf16.mxu0 0
  %212 = vmatmul.mubr.bf16.gmra.mrb[0].mxu0 %v107
  %v213 = vpop.f32.mrb[0].mxu0
  %v214 = vadd.f32 %v129, %v213
  %v215 = vpop.f32.mrb[0].mxu0
  %v216 = vpop.f32.mrb[0].mxu0
  %v217 = vadd.f32 %v129, %v216
  %v218 = vpop.f32.mrb[0].mxu0
  %219 = vdwg.mxu0
  %v220 = vld [vmem:[%s5] sm:$0xf]
  %v221 = vld [vmem:[%s5 + $0x4] sm:$0xf]
  %v222 = vunpack.c.l.bf16 %v220
  %v223 = vunpack.c.l.bf16 %v221
  %v224 = vadd.f32 %v214, %v222
  %v225 = vadd.f32 %v217, %v223
  %v226 = vsel %vm60, %v224, 0.0
  %227 = vadd.xlane.f32.xlu0 %v226
  %v228 = vpop.xlane.xlu0 %227
  %v229 = vsel %vm60, %v225, 0.0
  %230 = vadd.xlane.f32.xlu0 %v229
  %v231 = vpop.xlane.xlu0 %230
  %v232 = vrcp.pop 32.0
  %v233 = vmul.f32 %v228, %v232
  %v234 = vmul.f32 %v231, %v232
  %v235 = vsub.f32 %v224, %v233
  %v236 = vsub.f32 %v225, %v234
  %v237 = vmul.f32 %v235, %v235
  %v238 = vmul.f32 %v236, %v236
  %v239 = vsel %vm60, %v237, 0.0
  %240 = vadd.xlane.f32.xlu0 %v239
  %v241 = vpop.xlane.xlu0 %240
  %v242 = vsel %vm60, %v238, 0.0
  %243 = vadd.xlane.f32.xlu0 %v242
  %v244 = vpop.xlane.xlu0 %243
  %v245 = vmul.f32 %v241, %v232
  %v246 = vmul.f32 %v244, %v232
  %v247 = vadd.f32 %v245, 1e-05
  %v248 = vadd.f32 %v246, 1e-05
  %v249 = vrsqrt.pop %v247
  %v250 = vrsqrt.pop %v248
  %v251 = vmul.f32 %v235, %v249
  %v252 = vmul.f32 %v236, %v250
  %v253 = vld [vmem:[%s6] sm:$0x1]
  %v255 = vlaneseq
  %v256 = vshrl.u32 %v255, 7
  %v257 = vsub.s32 0, %v256
  %v258 = vrot.slane %v253, %v257
  %v260 = vmul.f32 %v251, %v258
  %v261 = vmul.f32 %v252, %v258
  %v262 = vld [vmem:[%s7] sm:$0x1]
  %v264 = vlaneseq
  %v265 = vshrl.u32 %v264, 7
  %v266 = vsub.s32 0, %v265
  %v267 = vrot.slane %v262, %v266
  %v269 = vadd.f32 %v260, %v267
  %v270 = vadd.f32 %v261, %v267
  %v271 = vpack.c.bf16 %v270, %v269
  %v273 = vunpack.c.l.b16 %v271
  %v274 = vunpack.c.h.b16 %v271
  %v275 = vpack.c.b16 %v273, %v273
  %v276 = vpack.c.b16 %v274, %v274
  %vm279 = vcmask 257024
  %280 = vst.msk [vmem:[%s8] sm:$0xf] %vm279, %v275
  %281 = vst.msk [vmem:[%s8 + $0x4] sm:$0xf] %vm279, %v276
  // Predicated region
  $region34: #{gpt_forward.21} parent=0 // pred_check
    _
  $region35: #{gpt_forward.21} parent=0 // pred_check_branch
    %283 = sbr.rel (0) target = $region37
  $region36: #{gpt_forward.21} parent=0 // pred_region
    _
  $region37: #{gpt_forward.21} parent=0 // pred_fallthru
    _
  // Predicated region
  $region38: #{gpt_forward.21} parent=0 // pred_check
    _
  $region39: #{gpt_forward.21} parent=0 // pred_check_branch
    %285 = sbr.rel (0) target = $region41
  $region40: #{gpt_forward.21} parent=0 // pred_region
    _
  $region41: #{gpt_forward.21} parent=0 // pred_fallthru
    _

// kernel: gpt_forward.29
$region0: #{gpt_forward.29}
  #allocation0 [shape = 'u32[]', space=smem, size = 0x4, offset = 0x4, fixed_abs, tag = 'smem constant byte address 0x4 - core index']
  #allocation1 [shape = 'u32[144,128]{1,0:T(1,128)}', space=vmem, size = 0x12000, scoped, tag = 'internal scratch']
  #allocation2 [shape = 'f32[16,128]{1,0:T(8,128)}', space=vmem, size = 0x2000, scoped, tag = 'scratch operand']
  %s0 = inlined_call_operand.vmem [shape: bf16[16,32], index: 0, kind: input, shape index: {}]
  %s1 = inlined_call_operand.vmem [shape: bf16[32,128], index: 1, kind: input, shape index: {}]
  %s2 = inlined_call_operand.vmem [shape: f32[1,128], index: 2, kind: input, shape index: {}]
  %s3 = inlined_call_operand.vmem [shape: f32[16,128], index: 3, kind: output, shape index: {}]
  %s4 = sld [smem:[#allocation0]]
  $region30: #{gpt_forward.29} parent=0
    _
  %s6 = ssub.s32 1, %s4
  %s7 = scalar_select 0, %s6, %s4
  // Predicated region
  $region2: #{gpt_forward.29} parent=0 // pred_check
    _
  $region3: #{gpt_forward.29} parent=0 // pred_check_branch
    %9 = sbr.rel (0) target = $region5
  $region4: #{gpt_forward.29} parent=0 // pred_region
    _
  $region5: #{gpt_forward.29} parent=0 // pred_fallthru
    _
  // Predicated region
  $region6: #{gpt_forward.29} parent=0 // pred_check
    _
  $region7: #{gpt_forward.29} parent=0 // pred_check_branch
    %11 = sbr.rel (0) target = $region9
  $region8: #{gpt_forward.29} parent=0 // pred_region
    _
  $region9: #{gpt_forward.29} parent=0 // pred_fallthru
    _
  // Predicated region
  $region10: #{gpt_forward.29} parent=0 // pred_check
    _
  $region11: #{gpt_forward.29} parent=0 // pred_check_branch
    %13 = sbr.rel (0) target = $region13
  $region12: #{gpt_forward.29} parent=0 // pred_region
    _
  $region13: #{gpt_forward.29} parent=0 // pred_fallthru
    _
  %p15 = scmp.eq.s32.totalorder 0, 0
  // Predicated region
  $region14: #{gpt_forward.29} parent=0 // pred_check
    %p16 = pneg %p15
  $region15: #{gpt_forward.29} parent=0 // pred_check_branch
    %18 = sbr.rel (%p16) target = $region17
  $region16: #{gpt_forward.29} parent=0 // pred_region
    %19 = vst [vmem:[#allocation2] sm:$0xff] 0.0
    %20 = vst [vmem:[#allocation2 + $0x8] sm:$0xff] 0.0
  $region17: #{gpt_forward.29} parent=0 // pred_fallthru
    _
  %v21 = vld [vmem:[#allocation2] sm:$0xff]
  %v22 = vld [vmem:[#allocation2 + $0x8] sm:$0xff]
  %v23 = vld [vmem:[%s0] sm:$0xf]
  %v24 = vld [vmem:[%s0 + $0x4] sm:$0xf]
  %v25 = vld [vmem:[%s1] sm:$0xf]
  %v26 = vld [vmem:[%s1 + $0x4] sm:$0xf]
  %v27 = vld [vmem:[%s1 + $0x8] sm:$0xf]
  %v28 = vld [vmem:[%s1 + $0xc] sm:$0xf]
  %v31 = vunpack.c.l.b16 %v23
  %v32 = vunpack.c.l.b16 %v24
  %v33 = vpack.c.b16 %v32, %v31
  %v38 = vunpack.c.l.b16 %v25
  %v39 = vunpack.c.l.b16 %v26
  %v40 = vunpack.c.l.b16 %v27
  %v41 = vunpack.c.l.b16 %v28
  %v42 = vpack.c.b16 %v39, %v38
  %v43 = vpack.c.b16 %v41, %v40
  %vm46 = vcmask 261120
  %v48 = vsel %vm46, %v33, 0
  %50 = vmatprep.subr.bf16.mxu0 0
  %51 = vmatpush1.bf16.msra.mxu0 %v42
  %52 = vmatprep.subr.bf16.mxu0 0
  %53 = vmatpush1.bf16.msra.mxu0 %v43
  %54 = vmatprep.subr.bf16.mxu0 0
  %55 = vmatpush1.bf16.msra.mxu0 0
  %56 = vmatprep.subr.bf16.mxu0 0
  %57 = vmatpush1.bf16.msra.mxu0 0
  %58 = vmatprep.subr.bf16.mxu0 0
  %59 = vmatpush1.bf16.msra.mxu0 0
  %60 = vmatprep.subr.bf16.mxu0 0
  %61 = vmatpush1.bf16.msra.mxu0 0
  %62 = vmatprep.subr.bf16.mxu0 0
  %63 = vmatpush1.bf16.msra.mxu0 0
  %64 = vmatprep.subr.bf16.mxu0 0
  %65 = vmatpush1.bf16.msra.mxu0 0
  %66 = vmatprep.subr.bf16.mxu0 0
  %67 = vmatpush1.bf16.msra.mxu0 0
  %68 = vmatprep.subr.bf16.mxu0 0
  %69 = vmatpush1.bf16.msra.mxu0 0
  %70 = vmatprep.subr.bf16.mxu0 0
  %71 = vmatpush1.bf16.msra.mxu0 0
  %72 = vmatprep.subr.bf16.mxu0 0
  %73 = vmatpush1.bf16.msra.mxu0 0
  %74 = vmatprep.subr.bf16.mxu0 0
  %75 = vmatpush1.bf16.msra.mxu0 0
  %76 = vmatprep.subr.bf16.mxu0 0
  %77 = vmatpush1.bf16.msra.mxu0 0
  %78 = vmatprep.subr.bf16.mxu0 0
  %79 = vmatpush1.bf16.msra.mxu0 0
  %80 = vmatprep.subr.bf16.mxu0 0
  %81 = vmatpush1.bf16.msra.mxu0 0
  %82 = vmatprep.mubr.bf16.mxu0 0
  %83 = vmatmul.mubr.bf16.gmra.mrb[0].mxu0 %v48
  %v84 = vpop.f32.mrb[0].mxu0
  %v85 = vadd.f32 0.0, %v84
  %v86 = vpop.f32.mrb[0].mxu0
  %v87 = vpop.f32.mrb[0].mxu0
  %v88 = vadd.f32 0.0, %v87
  %v89 = vpop.f32.mrb[0].mxu0
  %90 = vdwg.mxu0
  %v91 = vadd.f32 %v21, %v85
  %v92 = vadd.f32 %v22, %v88
  %93 = vst [vmem:[#allocation2] sm:$0xff] %v91
  %94 = vst [vmem:[#allocation2 + $0x8] sm:$0xff] %v92
  // Predicated region
  $region18: #{gpt_forward.29} parent=0 // pred_check
    %p95 = pneg %p15
  $region19: #{gpt_forward.29} parent=0 // pred_check_branch
    %97 = sbr.rel (%p95) target = $region21
  $region20: #{gpt_forward.29} parent=0 // pred_region
    %v98 = vld [vmem:[#allocation2] sm:$0xff]
    %v99 = vld [vmem:[#allocation2 + $0x8] sm:$0xff]
    %v100 = vld [vmem:[%s2] sm:$0x1]
    %v102 = vlaneseq
    %v103 = vshrl.u32 %v102, 7
    %v104 = vsub.s32 0, %v103
    %v105 = vrot.slane %v100, %v104
    %v107 = vadd.f32 %v98, %v105
    %v108 = vadd.f32 %v99, %v105
    %v109 = vlaneseq
    %v110 = vand.u32 %v109, 127
    %vm111 = vcmp.lt.s32.totalorder %v110, 50
    %v112 = vsel %vm111, %v107, -1e+30
    %v113 = vsel %vm111, %v108, -1e+30
    %114 = vmax.xlane.f32.xlu0 %v112
    %v115 = vpop.xlane.xlu0 %114
    %116 = vmax.xlane.f32.xlu0 %v113
    %v117 = vpop.xlane.xlu0 %116
    %v118 = vsub.f32 %v112, %v115
    %v119 = vsub.f32 %v113, %v117
    %v120 = vmul.f32 %v118, 1.442695
    %v121 = vpow.pop %v120
    %v122 = vmul.f32 %v119, 1.442695
    %v123 = vpow.pop %v122
    %124 = vadd.xlane.f32.xlu0 %v121
    %v125 = vpop.xlane.xlu0 %124
    %126 = vadd.xlane.f32.xlu0 %v123
    %v127 = vpop.xlane.xlu0 %126
    %v128 = vrcp.pop %v125
    %v129 = vmul.f32 %v121, %v128
    %v130 = vrcp.pop %v127
    %v131 = vmul.f32 %v123, %v130
    %132 = vst [vmem:[%s3] sm:$0xff] %v129
    %133 = vst [vmem:[%s3 + $0x8] sm:$0xff] %v131
  $region21: #{gpt_forward.29} parent=0 // pred_fallthru
    _
  // Predicated region
  $region22: #{gpt_forward.29} parent=0 // pred_check
    _
  $region23: #{gpt_forward.29} parent=0 // pred_check_branch
    %135 = sbr.rel (0) target = $region25
  $region24: #{gpt_forward.29} parent=0 // pred_region
    _
  $region25: #{gpt_forward.29} parent=0 // pred_fallthru
    _
  // Predicated region
  $region26: #{gpt_forward.29} parent=0 // pred_check
    _
  $region27: #{gpt_forward.29} parent=0 // pred_check_branch
    %137 = sbr.rel (0) target = $region29
  $region28: #{gpt_forward.29} parent=0 // pred_region
    _
  $region29: #{gpt_forward.29} parent=0 // pred_fallthru
    _

</llo_original>
